<compile_context>
chip_gen: v6e
topology: v6e:2x2x1
jax: 0.10.0
libtpu: 0.0.40
codegen_flags: <defaults>
</compile_context>

<pallas_src>
import jax
import jax.numpy as jnp
import numpy as np
from jax.experimental import pallas as pl
from jax.experimental.pallas import tpu as pltpu

# ---- module hyper-params (small, consistent with the PyTorch module) ----
N_FEATURES = 15
N_STATIC = 7
INPUT_SIZE = N_FEATURES + N_STATIC   # n_total_feats = 22
HIDDEN = 32
BATCH = 8
SEQ = 8
NUM_LAYERS = 1                       # module has num_layers = 1
# TODO(synk): dropout=0.0 and lstm.flatten_parameters() are no-ops and are not modeled.


def lstm_kernel(x_ref, h0_ref, c0_ref, wih_ref, whh_ref, b_ref, wout_ref, bout_ref,
                y_ref, hn_ref, cn_ref, hs_ref):
    """Single invocation: full LSTM recurrence over time + output Linear(H, 1).

    The g-gate columns of wih/whh/bias arrive pre-scaled by 2.0 from the
    wrapper, so each step needs exactly ONE full-width sigmoid
    (tanh(z) = 2*sigmoid(2z) - 1) plus the tanh(c) on the state.
    """
    T, B, D = x_ref.shape
    H = h0_ref.shape[-1]

    # ---- hoisted input projection: one MXU pass for all timesteps ----
    # x is laid out (T, B, D) so timestep t occupies rows [t*B, (t+1)*B).
    x_all = x_ref[...].reshape(T * B, D)                                   # (T*B, D)
    xproj = (jnp.dot(x_all, wih_ref[...], preferred_element_type=jnp.float32)
             + b_ref[...])                                                 # (T*B, 4H)

    whh = whh_ref[...]                                                     # (H, 4H)

    h = h0_ref[0]                                                          # (B, H)
    c = c0_ref[0]                                                          # (B, H)

    # Static Python loop: T is a compile-time constant -> fully unrolled
    # straight-line code with vreg-aligned static slices.
    # TODO(synk): pltpu.matmul_push_rhs/acc_lhs/pop could hold W_hh in the MXU
    # weight registers across all T steps; kept as jnp.dot for robust lowering.
    for t in range(T):
        gates = xproj[t * B:(t + 1) * B, :] + jnp.dot(
            h, whh, preferred_element_type=jnp.float32)                    # (B, 4H)
        # Single full-width EUP pass; g columns already hold 2*z_g, so the
        # cell gate is a cheap VALU fixup of the sigmoid result.
        sig = jax.nn.sigmoid(gates)
        i_g = sig[:, 0:H]
        f_g = sig[:, H:2 * H]
        g_g = 2.0 * sig[:, 2 * H:3 * H] - 1.0      # tanh(z) = 2*sigmoid(2z) - 1
        o_g = sig[:, 3 * H:4 * H]
        c = f_g * c + i_g * g_g
        h = o_g * jnp.tanh(c)
        hs_ref[t] = h            # per-step store into VMEM scratch (store slot slack)

    # final states written exactly once
    hn_ref[0] = h
    cn_ref[0] = c

    # ---- output Linear(H, 1): VPU broadcast-mul + lane reduction (no N=1 MXU matmul) ----
    hs_all = hs_ref[...]                                                   # (T, B, H)
    w3 = wout_ref[...].reshape(1, 1, H)                                    # (1, 1, H)
    y_ref[...] = jnp.sum(hs_all * w3, axis=-1, keepdims=True) + bout_ref[0]


def lstm_forward(x, h0, c0, w_ih, w_hh, b_ih, b_hh, w_out, b_out):
    """x: (B, T, D) float32, batch_first. Returns (y (B,T,1), (h_n (1,B,H), c_n (1,B,H)))."""
    x = x.astype(jnp.float32)
    B, T, D = x.shape
    H = h0.shape[-1]
    # The kernel's static slices rely on these vreg/sublane alignments.
    assert B % 8 == 0 and (4 * H) % 128 == 0, "need B % 8 == 0 and 4H % 128 == 0"

    # Time-major layout so each timestep is a contiguous, vreg-aligned (B, *) tile.
    x_tbd = jnp.transpose(x, (1, 0, 2))          # (T, B, D)

    # Pre-scale the cell-candidate (g) gate columns by 2 so the kernel can use
    # tanh(z) = 2*sigmoid(2z) - 1 with a single full-width sigmoid per step.
    # Multiplying by 2.0 is exact in fp32, so the i/f/o gates are untouched.
    gate_scale = jnp.concatenate([
        jnp.ones((2 * H,), jnp.float32),
        jnp.full((H,), 2.0, jnp.float32),
        jnp.ones((H,), jnp.float32),
    ])
    wih_t = w_ih.T * gate_scale                  # (D, 4H)
    whh_t = w_hh.T * gate_scale                  # (H, 4H)
    bias = ((b_ih + b_hh) * gate_scale).reshape(1, 4 * H)   # (1, 4H)
    bout = b_out.reshape(1)                      # (1,) scalar -> SMEM (no 2-D padding)

    vmem = pl.BlockSpec(memory_space=pltpu.MemorySpace.VMEM)
    smem = pl.BlockSpec(memory_space=pltpu.MemorySpace.SMEM)

    y_tb1, h_n, c_n = pl.pallas_call(
        lstm_kernel,
        out_shape=(
            jax.ShapeDtypeStruct((T, B, 1), jnp.float32),
            jax.ShapeDtypeStruct((1, B, H), jnp.float32),
            jax.ShapeDtypeStruct((1, B, H), jnp.float32),
        ),
        in_specs=[
            vmem,   # x (T, B, D)
            vmem,   # h0
            vmem,   # c0
            vmem,   # W_ih^T (g columns pre-scaled by 2)
            vmem,   # W_hh^T (g columns pre-scaled by 2)
            vmem,   # fused bias (1, 4H) (g columns pre-scaled by 2)
            vmem,   # w_out (1, H)
            smem,   # b_out scalar (1,)
        ],
        out_specs=(vmem, vmem, vmem),
        scratch_shapes=[pltpu.VMEM((T, B, H), jnp.float32)],   # per-step hidden states
    )(x_tbd, h0, c0, wih_t, whh_t, bias, w_out, bout)

    y = jnp.transpose(y_tb1, (1, 0, 2))          # (B, T, 1) batch_first
    return y, (h_n, c_n)


def reference_forward(x, h0, c0, w_ih, w_hh, b_ih, b_hh, w_out, b_out):
    """Pure-JAX reference matching torch.nn.LSTM + nn.Linear semantics."""
    H = h0.shape[-1]

    def step(carry, x_t):
        h, c = carry
        gates = x_t @ w_ih.T + h @ w_hh.T + b_ih + b_hh
        i = jax.nn.sigmoid(gates[:, 0:H])
        f = jax.nn.sigmoid(gates[:, H:2 * H])
        g = jnp.tanh(gates[:, 2 * H:3 * H])
        o = jax.nn.sigmoid(gates[:, 3 * H:4 * H])
        c_new = f * c + i * g
        h_new = o * jnp.tanh(c_new)
        return (h_new, c_new), h_new

    x_tbd = jnp.transpose(x.astype(jnp.float32), (1, 0, 2))
    (h_n, c_n), hs = jax.lax.scan(step, (h0[0], c0[0]), x_tbd)
    y = jnp.transpose(hs, (1, 0, 2)) @ w_out.T + b_out
    return y, (h_n[None], c_n[None])


def xavier_normal(key, shape):
    fan_out, fan_in = shape[-2], shape[-1]
    std = float(np.sqrt(2.0 / (fan_in + fan_out)))
    return std * jax.random.normal(key, shape, dtype=jnp.float32)


if __name__ == "__main__":
    key = jax.random.PRNGKey(0)
    ks = jax.random.split(key, 8)

    # deterministic synthetic parameters (shapes per nn.LSTM / nn.Linear)
    k_lstm = 1.0 / np.sqrt(HIDDEN)
    w_ih = jax.random.uniform(ks[0], (4 * HIDDEN, INPUT_SIZE), jnp.float32, -k_lstm, k_lstm)
    w_hh = jax.random.uniform(ks[1], (4 * HIDDEN, HIDDEN), jnp.float32, -k_lstm, k_lstm)
    b_ih = jax.random.uniform(ks[2], (4 * HIDDEN,), jnp.float32, -k_lstm, k_lstm)
    b_hh = jax.random.uniform(ks[3], (4 * HIDDEN,), jnp.float32, -k_lstm, k_lstm)
    w_out = jax.random.uniform(ks[4], (1, HIDDEN), jnp.float32, -k_lstm, k_lstm)
    b_out = jax.random.uniform(ks[5], (1,), jnp.float32, -k_lstm, k_lstm)

    # init_hidden(): xavier_normal_ initialized (num_layers, B, H) states
    h0 = xavier_normal(ks[6], (NUM_LAYERS, BATCH, HIDDEN))
    c0 = xavier_normal(ks[7], (NUM_LAYERS, BATCH, HIDDEN))

    # input x: (B, T, n_total_feats), batch_first
    x = jax.random.normal(jax.random.PRNGKey(42), (BATCH, SEQ, INPUT_SIZE), jnp.float32)

    y, (h_n, c_n) = lstm_forward(x, h0, c0, w_ih, w_hh, b_ih, b_hh, w_out, b_out)
    jax.block_until_ready((y, h_n, c_n))

    y_ref, (h_ref, c_ref) = reference_forward(x, h0, c0, w_ih, w_hh, b_ih, b_hh, w_out, b_out)
    # Tolerance slightly relaxed from 1e-5: the kernel's tanh(z) = 2*sigmoid(2z)-1
    # rewrite is exact in real arithmetic but rounds differently from XLA's tanh,
    # and the difference compounds through the T-step recurrent state.
    np.testing.assert_allclose(np.asarray(y), np.asarray(y_ref), rtol=1e-4, atol=2e-5)
    np.testing.assert_allclose(np.asarray(h_n), np.asarray(h_ref), rtol=1e-4, atol=2e-5)
    np.testing.assert_allclose(np.asarray(c_n), np.asarray(c_ref), rtol=1e-4, atol=2e-5)

    print("KERNEL_OK")
</pallas_src>

<mosaic_0001>
module attributes {stable_mosaic.version = 11 : i64} {
  func.func @lstm_kernel(%arg0: memref<8x8x22xf32, #tpu.memory_space<vmem>>, %arg1: memref<1x8x32xf32, #tpu.memory_space<vmem>>, %arg2: memref<1x8x32xf32, #tpu.memory_space<vmem>>, %arg3: memref<22x128xf32, #tpu.memory_space<vmem>>, %arg4: memref<32x128xf32, #tpu.memory_space<vmem>>, %arg5: memref<1x128xf32, #tpu.memory_space<vmem>>, %arg6: memref<1x32xf32, #tpu.memory_space<vmem>>, %arg7: memref<1xf32, #tpu.memory_space<smem>>, %arg8: memref<8x8x1xf32, #tpu.memory_space<vmem>>, %arg9: memref<1x8x32xf32, #tpu.memory_space<vmem>>, %arg10: memref<1x8x32xf32, #tpu.memory_space<vmem>>, %arg11: memref<8x8x32xf32, #tpu.memory_space<vmem>>) attributes {dimension_semantics = [], scalar_prefetch = 0 : i64, scratch_operands = 1 : i64, tpu.core_type = #tpu.core_type<tc>} {
    %c0 = arith.constant 0 : index
    %c0_0 = arith.constant 0 : index
    %c0_1 = arith.constant 0 : index
    %0 = vector.load %arg0[%c0, %c0_0, %c0_1] : memref<8x8x22xf32, #tpu.memory_space<vmem>>, vector<8x8x22xf32>
    %1 = vector.shape_cast %0 : vector<8x8x22xf32> to vector<64x22xf32>
    %c0_2 = arith.constant 0 : index
    %c0_3 = arith.constant 0 : index
    %2 = vector.load %arg3[%c0_2, %c0_3] : memref<22x128xf32, #tpu.memory_space<vmem>>, vector<22x128xf32>
    %cst = arith.constant dense<0.000000e+00> : vector<64x128xf32>
    %3 = tpu.matmul %1, %2, %cst {dimension_numbers = #tpu.dot_dimension_numbers<[1], [0], [0], [1], [0, 0, 1, 1], [], []>} : vector<64x22xf32>, vector<22x128xf32>, vector<64x128xf32> -> vector<64x128xf32>
    %c0_4 = arith.constant 0 : index
    %c0_5 = arith.constant 0 : index
    %4 = vector.load %arg5[%c0_4, %c0_5] : memref<1x128xf32, #tpu.memory_space<vmem>>, vector<1x128xf32>
    %5 = vector.broadcast %4 : vector<1x128xf32> to vector<64x128xf32>
    %6 = arith.addf %3, %5 : vector<64x128xf32>
    %c0_6 = arith.constant 0 : index
    %c0_7 = arith.constant 0 : index
    %7 = vector.load %arg4[%c0_6, %c0_7] : memref<32x128xf32, #tpu.memory_space<vmem>>, vector<32x128xf32>
    %c0_8 = arith.constant 0 : index
    %c0_9 = arith.constant 0 : index
    %c0_10 = arith.constant 0 : index
    %8 = vector.load %arg1[%c0_8, %c0_9, %c0_10] : memref<1x8x32xf32, #tpu.memory_space<vmem>>, vector<1x8x32xf32>
    %9 = vector.shape_cast %8 : vector<1x8x32xf32> to vector<8x32xf32>
    %c0_11 = arith.constant 0 : index
    %c0_12 = arith.constant 0 : index
    %c0_13 = arith.constant 0 : index
    %10 = vector.load %arg2[%c0_11, %c0_12, %c0_13] : memref<1x8x32xf32, #tpu.memory_space<vmem>>, vector<1x8x32xf32>
    %11 = vector.shape_cast %10 : vector<1x8x32xf32> to vector<8x32xf32>
    %12 = vector.extract_strided_slice %6 {offsets = [0, 0], sizes = [8, 128], strides = [1, 1]} : vector<64x128xf32> to vector<8x128xf32>
    %cst_14 = arith.constant dense<0.000000e+00> : vector<8x128xf32>
    %13 = tpu.matmul %9, %7, %cst_14 {dimension_numbers = #tpu.dot_dimension_numbers<[1], [0], [0], [1], [0, 0, 1, 1], [], []>} : vector<8x32xf32>, vector<32x128xf32>, vector<8x128xf32> -> vector<8x128xf32>
    %14 = arith.addf %12, %13 : vector<8x128xf32>
    %15 = arith.negf %14 : vector<8x128xf32>
    %16 = math.exp %15 : vector<8x128xf32>
    %cst_15 = arith.constant 1.000000e+00 : f32
    %17 = vector.broadcast %cst_15 : f32 to vector<8x128xf32>
    %18 = arith.addf %17, %16 : vector<8x128xf32>
    %19 = arith.divf %17, %18 : vector<8x128xf32>
    %20 = vector.extract_strided_slice %19 {offsets = [0, 0], sizes = [8, 32], strides = [1, 1]} : vector<8x128xf32> to vector<8x32xf32>
    %21 = vector.extract_strided_slice %19 {offsets = [0, 32], sizes = [8, 32], strides = [1, 1]} : vector<8x128xf32> to vector<8x32xf32>
    %22 = vector.extract_strided_slice %19 {offsets = [0, 64], sizes = [8, 32], strides = [1, 1]} : vector<8x128xf32> to vector<8x32xf32>
    %cst_16 = arith.constant 2.000000e+00 : f32
    %23 = vector.broadcast %cst_16 : f32 to vector<8x32xf32>
    %24 = arith.mulf %23, %22 : vector<8x32xf32>
    %cst_17 = arith.constant 1.000000e+00 : f32
    %25 = vector.broadcast %cst_17 : f32 to vector<8x32xf32>
    %26 = arith.subf %24, %25 : vector<8x32xf32>
    %27 = vector.extract_strided_slice %19 {offsets = [0, 96], sizes = [8, 32], strides = [1, 1]} : vector<8x128xf32> to vector<8x32xf32>
    %28 = arith.mulf %21, %11 : vector<8x32xf32>
    %29 = arith.mulf %20, %26 : vector<8x32xf32>
    %30 = arith.addf %28, %29 : vector<8x32xf32>
    %31 = math.tanh %30 : vector<8x32xf32>
    %32 = arith.mulf %27, %31 : vector<8x32xf32>
    %c0_18 = arith.constant 0 : index
    %c0_19 = arith.constant 0 : index
    %c0_20 = arith.constant 0 : index
    %33 = vector.load %arg11[%c0_18, %c0_19, %c0_20] : memref<8x8x32xf32, #tpu.memory_space<vmem>>, vector<1x8x32xf32>
    %34 = vector.shape_cast %33 : vector<1x8x32xf32> to vector<8x32xf32>
    %35 = vector.shape_cast %32 : vector<8x32xf32> to vector<1x8x32xf32>
    tpu.vector_store %arg11[%c0_18, %c0_19, %c0_20], %35 {strides = array<i32>} : memref<8x8x32xf32, #tpu.memory_space<vmem>>, vector<1x8x32xf32>,
    %36 = vector.extract_strided_slice %6 {offsets = [8, 0], sizes = [8, 128], strides = [1, 1]} : vector<64x128xf32> to vector<8x128xf32>
    %cst_21 = arith.constant dense<0.000000e+00> : vector<8x128xf32>
    %37 = tpu.matmul %32, %7, %cst_21 {dimension_numbers = #tpu.dot_dimension_numbers<[1], [0], [0], [1], [0, 0, 1, 1], [], []>} : vector<8x32xf32>, vector<32x128xf32>, vector<8x128xf32> -> vector<8x128xf32>
    %38 = arith.addf %36, %37 : vector<8x128xf32>
    %39 = arith.negf %38 : vector<8x128xf32>
    %40 = math.exp %39 : vector<8x128xf32>
    %cst_22 = arith.constant 1.000000e+00 : f32
    %41 = vector.broadcast %cst_22 : f32 to vector<8x128xf32>
    %42 = arith.addf %41, %40 : vector<8x128xf32>
    %43 = arith.divf %41, %42 : vector<8x128xf32>
    %44 = vector.extract_strided_slice %43 {offsets = [0, 0], sizes = [8, 32], strides = [1, 1]} : vector<8x128xf32> to vector<8x32xf32>
    %45 = vector.extract_strided_slice %43 {offsets = [0, 32], sizes = [8, 32], strides = [1, 1]} : vector<8x128xf32> to vector<8x32xf32>
    %46 = vector.extract_strided_slice %43 {offsets = [0, 64], sizes = [8, 32], strides = [1, 1]} : vector<8x128xf32> to vector<8x32xf32>
    %cst_23 = arith.constant 2.000000e+00 : f32
    %47 = vector.broadcast %cst_23 : f32 to vector<8x32xf32>
    %48 = arith.mulf %47, %46 : vector<8x32xf32>
    %cst_24 = arith.constant 1.000000e+00 : f32
    %49 = vector.broadcast %cst_24 : f32 to vector<8x32xf32>
    %50 = arith.subf %48, %49 : vector<8x32xf32>
    %51 = vector.extract_strided_slice %43 {offsets = [0, 96], sizes = [8, 32], strides = [1, 1]} : vector<8x128xf32> to vector<8x32xf32>
    %52 = arith.mulf %45, %30 : vector<8x32xf32>
    %53 = arith.mulf %44, %50 : vector<8x32xf32>
    %54 = arith.addf %52, %53 : vector<8x32xf32>
    %55 = math.tanh %54 : vector<8x32xf32>
    %56 = arith.mulf %51, %55 : vector<8x32xf32>
    %c1 = arith.constant 1 : index
    %c0_25 = arith.constant 0 : index
    %c0_26 = arith.constant 0 : index
    %57 = vector.load %arg11[%c1, %c0_25, %c0_26] : memref<8x8x32xf32, #tpu.memory_space<vmem>>, vector<1x8x32xf32>
    %58 = vector.shape_cast %57 : vector<1x8x32xf32> to vector<8x32xf32>
    %59 = vector.shape_cast %56 : vector<8x32xf32> to vector<1x8x32xf32>
    tpu.vector_store %arg11[%c1, %c0_25, %c0_26], %59 {strides = array<i32>} : memref<8x8x32xf32, #tpu.memory_space<vmem>>, vector<1x8x32xf32>,
    %60 = vector.extract_strided_slice %6 {offsets = [16, 0], sizes = [8, 128], strides = [1, 1]} : vector<64x128xf32> to vector<8x128xf32>
    %cst_27 = arith.constant dense<0.000000e+00> : vector<8x128xf32>
    %61 = tpu.matmul %56, %7, %cst_27 {dimension_numbers = #tpu.dot_dimension_numbers<[1], [0], [0], [1], [0, 0, 1, 1], [], []>} : vector<8x32xf32>, vector<32x128xf32>, vector<8x128xf32> -> vector<8x128xf32>
    %62 = arith.addf %60, %61 : vector<8x128xf32>
    %63 = arith.negf %62 : vector<8x128xf32>
    %64 = math.exp %63 : vector<8x128xf32>
    %cst_28 = arith.constant 1.000000e+00 : f32
    %65 = vector.broadcast %cst_28 : f32 to vector<8x128xf32>
    %66 = arith.addf %65, %64 : vector<8x128xf32>
    %67 = arith.divf %65, %66 : vector<8x128xf32>
    %68 = vector.extract_strided_slice %67 {offsets = [0, 0], sizes = [8, 32], strides = [1, 1]} : vector<8x128xf32> to vector<8x32xf32>
    %69 = vector.extract_strided_slice %67 {offsets = [0, 32], sizes = [8, 32], strides = [1, 1]} : vector<8x128xf32> to vector<8x32xf32>
    %70 = vector.extract_strided_slice %67 {offsets = [0, 64], sizes = [8, 32], strides = [1, 1]} : vector<8x128xf32> to vector<8x32xf32>
    %cst_29 = arith.constant 2.000000e+00 : f32
    %71 = vector.broadcast %cst_29 : f32 to vector<8x32xf32>
    %72 = arith.mulf %71, %70 : vector<8x32xf32>
    %cst_30 = arith.constant 1.000000e+00 : f32
    %73 = vector.broadcast %cst_30 : f32 to vector<8x32xf32>
    %74 = arith.subf %72, %73 : vector<8x32xf32>
    %75 = vector.extract_strided_slice %67 {offsets = [0, 96], sizes = [8, 32], strides = [1, 1]} : vector<8x128xf32> to vector<8x32xf32>
    %76 = arith.mulf %69, %54 : vector<8x32xf32>
    %77 = arith.mulf %68, %74 : vector<8x32xf32>
    %78 = arith.addf %76, %77 : vector<8x32xf32>
    %79 = math.tanh %78 : vector<8x32xf32>
    %80 = arith.mulf %75, %79 : vector<8x32xf32>
    %c2 = arith.constant 2 : index
    %c0_31 = arith.constant 0 : index
    %c0_32 = arith.constant 0 : index
    %81 = vector.load %arg11[%c2, %c0_31, %c0_32] : memref<8x8x32xf32, #tpu.memory_space<vmem>>, vector<1x8x32xf32>
    %82 = vector.shape_cast %81 : vector<1x8x32xf32> to vector<8x32xf32>
    %83 = vector.shape_cast %80 : vector<8x32xf32> to vector<1x8x32xf32>
    tpu.vector_store %arg11[%c2, %c0_31, %c0_32], %83 {strides = array<i32>} : memref<8x8x32xf32, #tpu.memory_space<vmem>>, vector<1x8x32xf32>,
    %84 = vector.extract_strided_slice %6 {offsets = [24, 0], sizes = [8, 128], strides = [1, 1]} : vector<64x128xf32> to vector<8x128xf32>
    %cst_33 = arith.constant dense<0.000000e+00> : vector<8x128xf32>
    %85 = tpu.matmul %80, %7, %cst_33 {dimension_numbers = #tpu.dot_dimension_numbers<[1], [0], [0], [1], [0, 0, 1, 1], [], []>} : vector<8x32xf32>, vector<32x128xf32>, vector<8x128xf32> -> vector<8x128xf32>
    %86 = arith.addf %84, %85 : vector<8x128xf32>
    %87 = arith.negf %86 : vector<8x128xf32>
    %88 = math.exp %87 : vector<8x128xf32>
    %cst_34 = arith.constant 1.000000e+00 : f32
    %89 = vector.broadcast %cst_34 : f32 to vector<8x128xf32>
    %90 = arith.addf %89, %88 : vector<8x128xf32>
    %91 = arith.divf %89, %90 : vector<8x128xf32>
    %92 = vector.extract_strided_slice %91 {offsets = [0, 0], sizes = [8, 32], strides = [1, 1]} : vector<8x128xf32> to vector<8x32xf32>
    %93 = vector.extract_strided_slice %91 {offsets = [0, 32], sizes = [8, 32], strides = [1, 1]} : vector<8x128xf32> to vector<8x32xf32>
    %94 = vector.extract_strided_slice %91 {offsets = [0, 64], sizes = [8, 32], strides = [1, 1]} : vector<8x128xf32> to vector<8x32xf32>
    %cst_35 = arith.constant 2.000000e+00 : f32
    %95 = vector.broadcast %cst_35 : f32 to vector<8x32xf32>
    %96 = arith.mulf %95, %94 : vector<8x32xf32>
    %cst_36 = arith.constant 1.000000e+00 : f32
    %97 = vector.broadcast %cst_36 : f32 to vector<8x32xf32>
    %98 = arith.subf %96, %97 : vector<8x32xf32>
    %99 = vector.extract_strided_slice %91 {offsets = [0, 96], sizes = [8, 32], strides = [1, 1]} : vector<8x128xf32> to vector<8x32xf32>
    %100 = arith.mulf %93, %78 : vector<8x32xf32>
    %101 = arith.mulf %92, %98 : vector<8x32xf32>
    %102 = arith.addf %100, %101 : vector<8x32xf32>
    %103 = math.tanh %102 : vector<8x32xf32>
    %104 = arith.mulf %99, %103 : vector<8x32xf32>
    %c3 = arith.constant 3 : index
    %c0_37 = arith.constant 0 : index
    %c0_38 = arith.constant 0 : index
    %105 = vector.load %arg11[%c3, %c0_37, %c0_38] : memref<8x8x32xf32, #tpu.memory_space<vmem>>, vector<1x8x32xf32>
    %106 = vector.shape_cast %105 : vector<1x8x32xf32> to vector<8x32xf32>
    %107 = vector.shape_cast %104 : vector<8x32xf32> to vector<1x8x32xf32>
    tpu.vector_store %arg11[%c3, %c0_37, %c0_38], %107 {strides = array<i32>} : memref<8x8x32xf32, #tpu.memory_space<vmem>>, vector<1x8x32xf32>,
    %108 = vector.extract_strided_slice %6 {offsets = [32, 0], sizes = [8, 128], strides = [1, 1]} : vector<64x128xf32> to vector<8x128xf32>
    %cst_39 = arith.constant dense<0.000000e+00> : vector<8x128xf32>
    %109 = tpu.matmul %104, %7, %cst_39 {dimension_numbers = #tpu.dot_dimension_numbers<[1], [0], [0], [1], [0, 0, 1, 1], [], []>} : vector<8x32xf32>, vector<32x128xf32>, vector<8x128xf32> -> vector<8x128xf32>
    %110 = arith.addf %108, %109 : vector<8x128xf32>
    %111 = arith.negf %110 : vector<8x128xf32>
    %112 = math.exp %111 : vector<8x128xf32>
    %cst_40 = arith.constant 1.000000e+00 : f32
    %113 = vector.broadcast %cst_40 : f32 to vector<8x128xf32>
    %114 = arith.addf %113, %112 : vector<8x128xf32>
    %115 = arith.divf %113, %114 : vector<8x128xf32>
    %116 = vector.extract_strided_slice %115 {offsets = [0, 0], sizes = [8, 32], strides = [1, 1]} : vector<8x128xf32> to vector<8x32xf32>
    %117 = vector.extract_strided_slice %115 {offsets = [0, 32], sizes = [8, 32], strides = [1, 1]} : vector<8x128xf32> to vector<8x32xf32>
    %118 = vector.extract_strided_slice %115 {offsets = [0, 64], sizes = [8, 32], strides = [1, 1]} : vector<8x128xf32> to vector<8x32xf32>
    %cst_41 = arith.constant 2.000000e+00 : f32
    %119 = vector.broadcast %cst_41 : f32 to vector<8x32xf32>
    %120 = arith.mulf %119, %118 : vector<8x32xf32>
    %cst_42 = arith.constant 1.000000e+00 : f32
    %121 = vector.broadcast %cst_42 : f32 to vector<8x32xf32>
    %122 = arith.subf %120, %121 : vector<8x32xf32>
    %123 = vector.extract_strided_slice %115 {offsets = [0, 96], sizes = [8, 32], strides = [1, 1]} : vector<8x128xf32> to vector<8x32xf32>
    %124 = arith.mulf %117, %102 : vector<8x32xf32>
    %125 = arith.mulf %116, %122 : vector<8x32xf32>
    %126 = arith.addf %124, %125 : vector<8x32xf32>
    %127 = math.tanh %126 : vector<8x32xf32>
    %128 = arith.mulf %123, %127 : vector<8x32xf32>
    %c4 = arith.constant 4 : index
    %c0_43 = arith.constant 0 : index
    %c0_44 = arith.constant 0 : index
    %129 = vector.load %arg11[%c4, %c0_43, %c0_44] : memref<8x8x32xf32, #tpu.memory_space<vmem>>, vector<1x8x32xf32>
    %130 = vector.shape_cast %129 : vector<1x8x32xf32> to vector<8x32xf32>
    %131 = vector.shape_cast %128 : vector<8x32xf32> to vector<1x8x32xf32>
    tpu.vector_store %arg11[%c4, %c0_43, %c0_44], %131 {strides = array<i32>} : memref<8x8x32xf32, #tpu.memory_space<vmem>>, vector<1x8x32xf32>,
    %132 = vector.extract_strided_slice %6 {offsets = [40, 0], sizes = [8, 128], strides = [1, 1]} : vector<64x128xf32> to vector<8x128xf32>
    %cst_45 = arith.constant dense<0.000000e+00> : vector<8x128xf32>
    %133 = tpu.matmul %128, %7, %cst_45 {dimension_numbers = #tpu.dot_dimension_numbers<[1], [0], [0], [1], [0, 0, 1, 1], [], []>} : vector<8x32xf32>, vector<32x128xf32>, vector<8x128xf32> -> vector<8x128xf32>
    %134 = arith.addf %132, %133 : vector<8x128xf32>
    %135 = arith.negf %134 : vector<8x128xf32>
    %136 = math.exp %135 : vector<8x128xf32>
    %cst_46 = arith.constant 1.000000e+00 : f32
    %137 = vector.broadcast %cst_46 : f32 to vector<8x128xf32>
    %138 = arith.addf %137, %136 : vector<8x128xf32>
    %139 = arith.divf %137, %138 : vector<8x128xf32>
    %140 = vector.extract_strided_slice %139 {offsets = [0, 0], sizes = [8, 32], strides = [1, 1]} : vector<8x128xf32> to vector<8x32xf32>
    %141 = vector.extract_strided_slice %139 {offsets = [0, 32], sizes = [8, 32], strides = [1, 1]} : vector<8x128xf32> to vector<8x32xf32>
    %142 = vector.extract_strided_slice %139 {offsets = [0, 64], sizes = [8, 32], strides = [1, 1]} : vector<8x128xf32> to vector<8x32xf32>
    %cst_47 = arith.constant 2.000000e+00 : f32
    %143 = vector.broadcast %cst_47 : f32 to vector<8x32xf32>
    %144 = arith.mulf %143, %142 : vector<8x32xf32>
    %cst_48 = arith.constant 1.000000e+00 : f32
    %145 = vector.broadcast %cst_48 : f32 to vector<8x32xf32>
    %146 = arith.subf %144, %145 : vector<8x32xf32>
    %147 = vector.extract_strided_slice %139 {offsets = [0, 96], sizes = [8, 32], strides = [1, 1]} : vector<8x128xf32> to vector<8x32xf32>
    %148 = arith.mulf %141, %126 : vector<8x32xf32>
    %149 = arith.mulf %140, %146 : vector<8x32xf32>
    %150 = arith.addf %148, %149 : vector<8x32xf32>
    %151 = math.tanh %150 : vector<8x32xf32>
    %152 = arith.mulf %147, %151 : vector<8x32xf32>
    %c5 = arith.constant 5 : index
    %c0_49 = arith.constant 0 : index
    %c0_50 = arith.constant 0 : index
    %153 = vector.load %arg11[%c5, %c0_49, %c0_50] : memref<8x8x32xf32, #tpu.memory_space<vmem>>, vector<1x8x32xf32>
    %154 = vector.shape_cast %153 : vector<1x8x32xf32> to vector<8x32xf32>
    %155 = vector.shape_cast %152 : vector<8x32xf32> to vector<1x8x32xf32>
    tpu.vector_store %arg11[%c5, %c0_49, %c0_50], %155 {strides = array<i32>} : memref<8x8x32xf32, #tpu.memory_space<vmem>>, vector<1x8x32xf32>,
    %156 = vector.extract_strided_slice %6 {offsets = [48, 0], sizes = [8, 128], strides = [1, 1]} : vector<64x128xf32> to vector<8x128xf32>
    %cst_51 = arith.constant dense<0.000000e+00> : vector<8x128xf32>
    %157 = tpu.matmul %152, %7, %cst_51 {dimension_numbers = #tpu.dot_dimension_numbers<[1], [0], [0], [1], [0, 0, 1, 1], [], []>} : vector<8x32xf32>, vector<32x128xf32>, vector<8x128xf32> -> vector<8x128xf32>
    %158 = arith.addf %156, %157 : vector<8x128xf32>
    %159 = arith.negf %158 : vector<8x128xf32>
    %160 = math.exp %159 : vector<8x128xf32>
    %cst_52 = arith.constant 1.000000e+00 : f32
    %161 = vector.broadcast %cst_52 : f32 to vector<8x128xf32>
    %162 = arith.addf %161, %160 : vector<8x128xf32>
    %163 = arith.divf %161, %162 : vector<8x128xf32>
    %164 = vector.extract_strided_slice %163 {offsets = [0, 0], sizes = [8, 32], strides = [1, 1]} : vector<8x128xf32> to vector<8x32xf32>
    %165 = vector.extract_strided_slice %163 {offsets = [0, 32], sizes = [8, 32], strides = [1, 1]} : vector<8x128xf32> to vector<8x32xf32>
    %166 = vector.extract_strided_slice %163 {offsets = [0, 64], sizes = [8, 32], strides = [1, 1]} : vector<8x128xf32> to vector<8x32xf32>
    %cst_53 = arith.constant 2.000000e+00 : f32
    %167 = vector.broadcast %cst_53 : f32 to vector<8x32xf32>
    %168 = arith.mulf %167, %166 : vector<8x32xf32>
    %cst_54 = arith.constant 1.000000e+00 : f32
    %169 = vector.broadcast %cst_54 : f32 to vector<8x32xf32>
    %170 = arith.subf %168, %169 : vector<8x32xf32>
    %171 = vector.extract_strided_slice %163 {offsets = [0, 96], sizes = [8, 32], strides = [1, 1]} : vector<8x128xf32> to vector<8x32xf32>
    %172 = arith.mulf %165, %150 : vector<8x32xf32>
    %173 = arith.mulf %164, %170 : vector<8x32xf32>
    %174 = arith.addf %172, %173 : vector<8x32xf32>
    %175 = math.tanh %174 : vector<8x32xf32>
    %176 = arith.mulf %171, %175 : vector<8x32xf32>
    %c6 = arith.constant 6 : index
    %c0_55 = arith.constant 0 : index
    %c0_56 = arith.constant 0 : index
    %177 = vector.load %arg11[%c6, %c0_55, %c0_56] : memref<8x8x32xf32, #tpu.memory_space<vmem>>, vector<1x8x32xf32>
    %178 = vector.shape_cast %177 : vector<1x8x32xf32> to vector<8x32xf32>
    %179 = vector.shape_cast %176 : vector<8x32xf32> to vector<1x8x32xf32>
    tpu.vector_store %arg11[%c6, %c0_55, %c0_56], %179 {strides = array<i32>} : memref<8x8x32xf32, #tpu.memory_space<vmem>>, vector<1x8x32xf32>,
    %180 = vector.extract_strided_slice %6 {offsets = [56, 0], sizes = [8, 128], strides = [1, 1]} : vector<64x128xf32> to vector<8x128xf32>
    %cst_57 = arith.constant dense<0.000000e+00> : vector<8x128xf32>
    %181 = tpu.matmul %176, %7, %cst_57 {dimension_numbers = #tpu.dot_dimension_numbers<[1], [0], [0], [1], [0, 0, 1, 1], [], []>} : vector<8x32xf32>, vector<32x128xf32>, vector<8x128xf32> -> vector<8x128xf32>
    %182 = arith.addf %180, %181 : vector<8x128xf32>
    %183 = arith.negf %182 : vector<8x128xf32>
    %184 = math.exp %183 : vector<8x128xf32>
    %cst_58 = arith.constant 1.000000e+00 : f32
    %185 = vector.broadcast %cst_58 : f32 to vector<8x128xf32>
    %186 = arith.addf %185, %184 : vector<8x128xf32>
    %187 = arith.divf %185, %186 : vector<8x128xf32>
    %188 = vector.extract_strided_slice %187 {offsets = [0, 0], sizes = [8, 32], strides = [1, 1]} : vector<8x128xf32> to vector<8x32xf32>
    %189 = vector.extract_strided_slice %187 {offsets = [0, 32], sizes = [8, 32], strides = [1, 1]} : vector<8x128xf32> to vector<8x32xf32>
    %190 = vector.extract_strided_slice %187 {offsets = [0, 64], sizes = [8, 32], strides = [1, 1]} : vector<8x128xf32> to vector<8x32xf32>
    %cst_59 = arith.constant 2.000000e+00 : f32
    %191 = vector.broadcast %cst_59 : f32 to vector<8x32xf32>
    %192 = arith.mulf %191, %190 : vector<8x32xf32>
    %cst_60 = arith.constant 1.000000e+00 : f32
    %193 = vector.broadcast %cst_60 : f32 to vector<8x32xf32>
    %194 = arith.subf %192, %193 : vector<8x32xf32>
    %195 = vector.extract_strided_slice %187 {offsets = [0, 96], sizes = [8, 32], strides = [1, 1]} : vector<8x128xf32> to vector<8x32xf32>
    %196 = arith.mulf %189, %174 : vector<8x32xf32>
    %197 = arith.mulf %188, %194 : vector<8x32xf32>
    %198 = arith.addf %196, %197 : vector<8x32xf32>
    %199 = math.tanh %198 : vector<8x32xf32>
    %200 = arith.mulf %195, %199 : vector<8x32xf32>
    %c7 = arith.constant 7 : index
    %c0_61 = arith.constant 0 : index
    %c0_62 = arith.constant 0 : index
    %201 = vector.load %arg11[%c7, %c0_61, %c0_62] : memref<8x8x32xf32, #tpu.memory_space<vmem>>, vector<1x8x32xf32>
    %202 = vector.shape_cast %201 : vector<1x8x32xf32> to vector<8x32xf32>
    %203 = vector.shape_cast %200 : vector<8x32xf32> to vector<1x8x32xf32>
    tpu.vector_store %arg11[%c7, %c0_61, %c0_62], %203 {strides = array<i32>} : memref<8x8x32xf32, #tpu.memory_space<vmem>>, vector<1x8x32xf32>,
    %c0_63 = arith.constant 0 : index
    %c0_64 = arith.constant 0 : index
    %c0_65 = arith.constant 0 : index
    %204 = vector.load %arg9[%c0_63, %c0_64, %c0_65] : memref<1x8x32xf32, #tpu.memory_space<vmem>>, vector<1x8x32xf32>
    %205 = vector.shape_cast %204 : vector<1x8x32xf32> to vector<8x32xf32>
    %206 = vector.shape_cast %200 : vector<8x32xf32> to vector<1x8x32xf32>
    tpu.vector_store %arg9[%c0_63, %c0_64, %c0_65], %206 {strides = array<i32>} : memref<1x8x32xf32, #tpu.memory_space<vmem>>, vector<1x8x32xf32>,
    %c0_66 = arith.constant 0 : index
    %c0_67 = arith.constant 0 : index
    %c0_68 = arith.constant 0 : index
    %207 = vector.load %arg10[%c0_66, %c0_67, %c0_68] : memref<1x8x32xf32, #tpu.memory_space<vmem>>, vector<1x8x32xf32>
    %208 = vector.shape_cast %207 : vector<1x8x32xf32> to vector<8x32xf32>
    %209 = vector.shape_cast %198 : vector<8x32xf32> to vector<1x8x32xf32>
    tpu.vector_store %arg10[%c0_66, %c0_67, %c0_68], %209 {strides = array<i32>} : memref<1x8x32xf32, #tpu.memory_space<vmem>>, vector<1x8x32xf32>,
    %c0_69 = arith.constant 0 : index
    %c0_70 = arith.constant 0 : index
    %c0_71 = arith.constant 0 : index
    %210 = vector.load %arg11[%c0_69, %c0_70, %c0_71] : memref<8x8x32xf32, #tpu.memory_space<vmem>>, vector<8x8x32xf32>
    %c0_72 = arith.constant 0 : index
    %c0_73 = arith.constant 0 : index
    %211 = vector.load %arg6[%c0_72, %c0_73] : memref<1x32xf32, #tpu.memory_space<vmem>>, vector<1x32xf32>
    %212 = vector.shape_cast %211 : vector<1x32xf32> to vector<1x1x32xf32>
    %213 = vector.broadcast %212 : vector<1x1x32xf32> to vector<8x8x32xf32>
    %214 = arith.mulf %210, %213 : vector<8x8x32xf32>
    %cst_74 = arith.constant dense<0.000000e+00> : vector<8x8xf32>
    %215 = vector.multi_reduction <add>, %214, %cst_74 [2] : vector<8x8x32xf32> to vector<8x8xf32>
    %216 = vector.shape_cast %215 : vector<8x8xf32> to vector<8x8x1xf32>
    %c0_75 = arith.constant 0 : index
    %217 = memref.load %arg7[%c0_75] : memref<1xf32, #tpu.memory_space<smem>>
    %218 = vector.broadcast %217 : f32 to vector<8x8x1xf32>
    %219 = arith.addf %216, %218 : vector<8x8x1xf32>
    %c0_76 = arith.constant 0 : index
    %c0_77 = arith.constant 0 : index
    %c0_78 = arith.constant 0 : index
    %220 = vector.load %arg8[%c0_76, %c0_77, %c0_78] : memref<8x8x1xf32, #tpu.memory_space<vmem>>, vector<8x8x1xf32>
    tpu.vector_store %arg8[%c0_76, %c0_77, %c0_78], %219 {strides = array<i32>} : memref<8x8x1xf32, #tpu.memory_space<vmem>>, vector<8x8x1xf32>,
    return
  }
}

</mosaic_0001>

<llo_original>
// kernel: tpu_custom_call.1
$region0: #{tpu_custom_call.1}
  #allocation0 [shape = 'u32[]', space=smem, size = 0x4, offset = 0x4, fixed_abs, tag = 'smem constant byte address 0x4 - core index']
  #allocation1 [shape = 'u32[144,128]{1,0:T(1,128)}', space=vmem, size = 0x12000, scoped, tag = 'internal scratch']
  #allocation2 [shape = 'f32[8,8,32]{2,1,0:T(8,128)}', space=vmem, size = 0x8000, scoped, tag = 'scratch operand']
  #allocation3 [shape = 'f32[1]{0:T(128)S(6)}', space=smem, size = 0x200, scoped, tag = 'scoped memory for tpu_custom_call.1']
  %s0 = inlined_call_operand.hbm [shape: f32[8,8,22], index: 0, kind: input, shape index: {}]
  %s1 = inlined_call_operand.hbm [shape: f32[1,8,32], index: 1, kind: input, shape index: {}]
  %s2 = inlined_call_operand.hbm [shape: f32[1,8,32], index: 2, kind: input, shape index: {}]
  %s3 = inlined_call_operand.hbm [shape: f32[22,128], index: 3, kind: input, shape index: {}]
  %s4 = inlined_call_operand.hbm [shape: f32[32,128], index: 4, kind: input, shape index: {}]
  %s5 = inlined_call_operand.vmem [shape: f32[1,128], index: 5, kind: input, shape index: {}]
  %s6 = inlined_call_operand.vmem [shape: f32[1,32], index: 6, kind: input, shape index: {}]
  %s7 = inlined_call_operand.<no memory space> [shape: f32[1], index: 7, kind: input, shape index: {}]
  %s8 = inlined_call_operand.vmem [shape: f32[8,8,1], index: 8, kind: output, shape index: {0}]
  %s9 = inlined_call_operand.hbm [shape: f32[1,8,32], index: 9, kind: output, shape index: {1}]
  %s10 = inlined_call_operand.hbm [shape: f32[1,8,32], index: 10, kind: output, shape index: {2}]
  %11 = xla_tuple %s8, %s9, %s10
  %s12 = sld [smem:[#allocation0]]
  $region78: #{tpu_custom_call.1} parent=0
    _
  %s14 = ssub.s32 1, %s12
  %s15 = scalar_select 0, %s14, %s12
  %16 = sst [smem:[#allocation3]] %s7
  $region1: #{tpu_custom_call.1} parent=0
    #allocation4 [shape = 'u8[32768]{0}', space=vmem, size = 0x8000, scoped, tag = 'input window, operand 0, single buffered']
    #allocation5 [shape = 's32[1]{0}', space=sflag, size = 0x4, scoped, tag = 'scoped memory for tpu_custom_call.1']
    #allocation6 [shape = 's32[1]{0}', space=sflag, size = 0x4, scoped, tag = 'scoped memory for tpu_custom_call.1']
    #allocation7 [shape = 'u8[4096]{0}', space=vmem, size = 0x1000, scoped, tag = 'input window, operand 1, single buffered']
    #allocation8 [shape = 's32[1]{0}', space=sflag, size = 0x4, scoped, tag = 'scoped memory for tpu_custom_call.1']
    #allocation9 [shape = 'u8[4096]{0}', space=vmem, size = 0x1000, scoped, tag = 'input window, operand 2, single buffered']
    #allocation10 [shape = 'u8[12288]{0}', space=vmem, size = 0x3000, scoped, tag = 'input window, operand 3, single buffered']
    #allocation11 [shape = 's32[1]{0}', space=sflag, size = 0x4, scoped, tag = 'scoped memory for tpu_custom_call.1']
    #allocation12 [shape = 'u8[16384]{0}', space=vmem, size = 0x4000, scoped, tag = 'input window, operand 4, single buffered']
    #allocation13 [shape = 'u8[4096]{0}', space=vmem, size = 0x1000, scoped, tag = 'output window, operand 1, single buffered']
    #allocation14 [shape = 'u8[4096]{0}', space=vmem, size = 0x1000, scoped, tag = 'output window, operand 2, single buffered']
    #allocation15 [shape = 's32[1]{0}', space=sflag, size = 0x4, scoped, tag = 'scoped memory for tpu_custom_call.1']
    %17 = vsyncpa [#allocation5], 0
    %18 = vsyncpa [#allocation8], 0
    %19 = vsyncpa [#allocation11], 0
    %20 = vsyncpa [#allocation6], 0
    %21 = vsyncpa [#allocation15], 0
    // Predicated region
    $region2: #{tpu_custom_call.1} parent=1 // pred_check
      _
    $region3: #{tpu_custom_call.1} parent=1 // pred_check_branch
      %23 = sbr.rel (0) target = $region5
    $region4: #{tpu_custom_call.1} parent=1 // pred_region
      %s25 = ssub.s32 1024, 1024
      %26 = vsyncadd [#allocation5], %s25
      %s27 = sshll.u32 [#allocation4], 4
      %s28 = int_to_ptr.vmem [resolvable:$true] %s27
      %33 = dma.hbm_to_vmem [thread:$0]  %s0, 1024, %s28, [#allocation5], 128, 128, 8
    $region5: #{tpu_custom_call.1} parent=1 // pred_fallthru
      _
    // Predicated region
    $region6: #{tpu_custom_call.1} parent=1 // pred_check
      _
    $region7: #{tpu_custom_call.1} parent=1 // pred_check_branch
      %35 = sbr.rel (0) target = $region9
    $region8: #{tpu_custom_call.1} parent=1 // pred_region
      %s37 = ssub.s32 128, 128
      %38 = vsyncadd [#allocation8], %s37
      %s40 = sshll.u32 [#allocation7], 4
      %s41 = int_to_ptr.vmem [resolvable:$true] %s40
      %43 = dma.hbm_to_vmem [thread:$0]  %s1, 128, %s41, [#allocation8]
    $region9: #{tpu_custom_call.1} parent=1 // pred_fallthru
      _
    // Predicated region
    $region10: #{tpu_custom_call.1} parent=1 // pred_check
      _
    $region11: #{tpu_custom_call.1} parent=1 // pred_check_branch
      %45 = sbr.rel (0) target = $region13
    $region12: #{tpu_custom_call.1} parent=1 // pred_region
      %s47 = ssub.s32 128, 128
      %48 = vsyncadd [#allocation8], %s47
      %s50 = sshll.u32 [#allocation9], 4
      %s51 = int_to_ptr.vmem [resolvable:$true] %s50
      %53 = dma.hbm_to_vmem [thread:$0]  %s2, 128, %s51, [#allocation8]
    $region13: #{tpu_custom_call.1} parent=1 // pred_fallthru
      _
    // Predicated region
    $region14: #{tpu_custom_call.1} parent=1 // pred_check
      _
    $region15: #{tpu_custom_call.1} parent=1 // pred_check_branch
      %55 = sbr.rel (0) target = $region17
    $region16: #{tpu_custom_call.1} parent=1 // pred_region
      %s57 = ssub.s32 384, 384
      %58 = vsyncadd [#allocation11], %s57
      %s59 = sshll.u32 [#allocation10], 4
      %s60 = int_to_ptr.vmem [resolvable:$true] %s59
      %65 = dma.hbm_to_vmem [thread:$0]  %s3, 384, %s60, [#allocation11], 128, 128, 8
    $region17: #{tpu_custom_call.1} parent=1 // pred_fallthru
      _
    // Predicated region
    $region18: #{tpu_custom_call.1} parent=1 // pred_check
      _
    $region19: #{tpu_custom_call.1} parent=1 // pred_check_branch
      %67 = sbr.rel (0) target = $region21
    $region20: #{tpu_custom_call.1} parent=1 // pred_region
      %s69 = ssub.s32 512, 512
      %70 = vsyncadd [#allocation11], %s69
      %s71 = sshll.u32 [#allocation12], 4
      %s72 = int_to_ptr.vmem [resolvable:$true] %s71
      %77 = dma.hbm_to_vmem [thread:$0]  %s4, 512, %s72, [#allocation11], 128, 128, 8
    $region21: #{tpu_custom_call.1} parent=1 // pred_fallthru
      _
    // Predicated region
    $region22: #{tpu_custom_call.1} parent=1 // pred_check
      _
    $region23: #{tpu_custom_call.1} parent=1 // pred_check_branch
      %79 = sbr.rel (0) target = $region25
    $region24: #{tpu_custom_call.1} parent=1 // pred_region
      _
    $region25: #{tpu_custom_call.1} parent=1 // pred_fallthru
      _
    // Predicated region
    $region26: #{tpu_custom_call.1} parent=1 // pred_check
      _
    $region27: #{tpu_custom_call.1} parent=1 // pred_check_branch
      %81 = sbr.rel (0) target = $region29
    $region28: #{tpu_custom_call.1} parent=1 // pred_region
      _
    $region29: #{tpu_custom_call.1} parent=1 // pred_fallthru
      _
    // Predicated region
    $region30: #{tpu_custom_call.1} parent=1 // pred_check
      _
    $region31: #{tpu_custom_call.1} parent=1 // pred_check_branch
      %83 = sbr.rel (0) target = $region33
    $region32: #{tpu_custom_call.1} parent=1 // pred_region
      _
    $region33: #{tpu_custom_call.1} parent=1 // pred_fallthru
      _
    // Predicated region
    $region34: #{tpu_custom_call.1} parent=1 // pred_check
      _
    $region35: #{tpu_custom_call.1} parent=1 // pred_check_branch
      %85 = sbr.rel (0) target = $region37
    $region36: #{tpu_custom_call.1} parent=1 // pred_region
      %86 = dma.done [#allocation5], 1024
    $region37: #{tpu_custom_call.1} parent=1 // pred_fallthru
      _
    // Predicated region
    $region38: #{tpu_custom_call.1} parent=1 // pred_check
      _
    $region39: #{tpu_custom_call.1} parent=1 // pred_check_branch
      %88 = sbr.rel (0) target = $region41
    $region40: #{tpu_custom_call.1} parent=1 // pred_region
      %89 = dma.done [#allocation8], 128
    $region41: #{tpu_custom_call.1} parent=1 // pred_fallthru
      _
    // Predicated region
    $region42: #{tpu_custom_call.1} parent=1 // pred_check
      _
    $region43: #{tpu_custom_call.1} parent=1 // pred_check_branch
      %91 = sbr.rel (0) target = $region45
    $region44: #{tpu_custom_call.1} parent=1 // pred_region
      %92 = dma.done [#allocation8], 128
    $region45: #{tpu_custom_call.1} parent=1 // pred_fallthru
      _
    // Predicated region
    $region46: #{tpu_custom_call.1} parent=1 // pred_check
      _
    $region47: #{tpu_custom_call.1} parent=1 // pred_check_branch
      %94 = sbr.rel (0) target = $region49
    $region48: #{tpu_custom_call.1} parent=1 // pred_region
      %95 = dma.done [#allocation11], 384
    $region49: #{tpu_custom_call.1} parent=1 // pred_fallthru
      _
    // Predicated region
    $region50: #{tpu_custom_call.1} parent=1 // pred_check
      _
    $region51: #{tpu_custom_call.1} parent=1 // pred_check_branch
      %97 = sbr.rel (0) target = $region53
    $region52: #{tpu_custom_call.1} parent=1 // pred_region
      %98 = dma.done [#allocation11], 512
    $region53: #{tpu_custom_call.1} parent=1 // pred_fallthru
      _
    %v99 = vld [vmem:[#allocation4] sm:$0xff]
    %v100 = vld [vmem:[#allocation4 + $0x8] sm:$0xff]
    %v101 = vld [vmem:[#allocation4 + $0x10] sm:$0xff]
    %v102 = vld [vmem:[#allocation4 + $0x18] sm:$0xff]
    %v103 = vld [vmem:[#allocation4 + $0x20] sm:$0xff]
    %v104 = vld [vmem:[#allocation4 + $0x28] sm:$0xff]
    %v105 = vld [vmem:[#allocation4 + $0x30] sm:$0xff]
    %v106 = vld [vmem:[#allocation4 + $0x38] sm:$0xff]
    %v107 = vld [vmem:[#allocation10] sm:$0xff]
    %v108 = vld [vmem:[#allocation10 + $0x8] sm:$0xff]
    %v109 = vld [vmem:[#allocation10 + $0x10] sm:$0x3f]
    %v110 = vld [vmem:[%s5] sm:$0x1]
    %v112 = vlaneseq
    %v113 = vshrl.u32 %v112, 7
    %v114 = vsub.s32 0, %v113
    %v115 = vrot.slane %v110, %v114
    %vm117 = vcmask 179200
    %v119 = vsel %vm117, %v99, 0
    %v122 = vsel %vm117, %v100, 0
    %v125 = vsel %vm117, %v101, 0
    %v128 = vsel %vm117, %v102, 0
    %v131 = vsel %vm117, %v103, 0
    %v134 = vsel %vm117, %v104, 0
    %v137 = vsel %vm117, %v105, 0
    %v140 = vsel %vm117, %v106, 0
    %vm142 = vcmask 1045504
    %v144 = vsel %vm142, %v109, 0
    %146 = vmatprep.subr.mxu0 0.0
    %147 = vmatpush1.msra.mxu0 0.0
    %148 = vmatprep.subr.mxu0 0.0
    %149 = vmatpush1.msra.mxu0 0.0
    %150 = vmatprep.subr.mxu0 0.0
    %151 = vmatpush1.msra.mxu0 0.0
    %152 = vmatprep.subr.mxu0 0.0
    %153 = vmatpush1.msra.mxu0 0.0
    %154 = vmatprep.subr.mxu0 0.0
    %155 = vmatpush1.msra.mxu0 0.0
    %156 = vmatprep.subr.mxu0 0.0
    %157 = vmatpush1.msra.mxu0 0.0
    %158 = vmatprep.subr.mxu0 0.0
    %159 = vmatpush1.msra.mxu0 0.0
    %160 = vmatprep.subr.mxu0 0.0
    %161 = vmatpush1.msra.mxu0 0.0
    %162 = vmatprep.subr.mxu0 0.0
    %163 = vmatpush1.msra.mxu0 0.0
    %164 = vmatprep.subr.mxu0 0.0
    %165 = vmatpush1.msra.mxu0 0.0
    %166 = vmatprep.subr.mxu0 0.0
    %167 = vmatpush1.msra.mxu0 0.0
    %168 = vmatprep.subr.mxu0 0.0
    %169 = vmatpush1.msra.mxu0 0.0
    %170 = vmatprep.subr.mxu0 0.0
    %171 = vmatpush1.msra.mxu0 0.0
    %172 = vmatprep.subr.mxu0 0.0
    %173 = vmatpush1.msra.mxu0 %v144
    %174 = vmatprep.subr.mxu0 0.0
    %175 = vmatpush1.msra.mxu0 %v108
    %176 = vmatprep.subr.mxu0 0.0
    %177 = vmatpush1.msra.mxu0 %v107
    %178 = vmatprep.subr.mxu0 0.0
    %179 = vmatpush2.msra.mxu0 0.0
    %180 = vmatprep.subr.mxu0 0.0
    %181 = vmatpush2.msra.mxu0 0.0
    %182 = vmatprep.subr.mxu0 0.0
    %183 = vmatpush2.msra.mxu0 0.0
    %184 = vmatprep.subr.mxu0 0.0
    %185 = vmatpush2.msra.mxu0 0.0
    %186 = vmatprep.subr.mxu0 0.0
    %187 = vmatpush2.msra.mxu0 0.0
    %188 = vmatprep.subr.mxu0 0.0
    %189 = vmatpush2.msra.mxu0 0.0
    %190 = vmatprep.subr.mxu0 0.0
    %191 = vmatpush2.msra.mxu0 0.0
    %192 = vmatprep.subr.mxu0 0.0
    %193 = vmatpush2.msra.mxu0 0.0
    %194 = vmatprep.subr.mxu0 0.0
    %195 = vmatpush2.msra.mxu0 0.0
    %196 = vmatprep.subr.mxu0 0.0
    %197 = vmatpush2.msra.mxu0 0.0
    %198 = vmatprep.subr.mxu0 0.0
    %199 = vmatpush2.msra.mxu0 0.0
    %200 = vmatprep.subr.mxu0 0.0
    %201 = vmatpush2.msra.mxu0 0.0
    %202 = vmatprep.subr.mxu0 0.0
    %203 = vmatpush2.msra.mxu0 0.0
    %204 = vmatprep.subr.mxu0 0.0
    %205 = vmatpush2.msra.mxu0 0.0
    %206 = vmatprep.subr.mxu0 0.0
    %207 = vmatpush2.msra.mxu0 0.0
    %208 = vmatprep.subr.mxu0 0.0
    %209 = vmatpush2.msra.mxu0 0.0
    %210 = vmatprep.mubr.f32.mxu0 0.0
    %211 = vmatmul.mubr.f32.gmra.mxu0 %v119
    %v212 = vpop.f32.mrf.mxu0
    %v213 = vadd.f32 %v115, %v212
    %v214 = vpop.f32.mrf.mxu0
    %215 = vmatprep.mubr.f32.mxu0 0.0
    %216 = vmatmul.mubr.f32.gmra.mxu0 %v122
    %v217 = vpop.f32.mrf.mxu0
    %v218 = vadd.f32 %v115, %v217
    %v219 = vpop.f32.mrf.mxu0
    %220 = vmatprep.mubr.f32.mxu0 0.0
    %221 = vmatmul.mubr.f32.gmra.mxu0 %v125
    %v222 = vpop.f32.mrf.mxu0
    %v223 = vadd.f32 %v115, %v222
    %v224 = vpop.f32.mrf.mxu0
    %225 = vmatprep.mubr.f32.mxu0 0.0
    %226 = vmatmul.mubr.f32.gmra.mxu0 %v128
    %v227 = vpop.f32.mrf.mxu0
    %v228 = vadd.f32 %v115, %v227
    %v229 = vpop.f32.mrf.mxu0
    %230 = vmatprep.mubr.f32.mxu0 0.0
    %231 = vmatmul.mubr.f32.gmra.mxu0 %v131
    %v232 = vpop.f32.mrf.mxu0
    %v233 = vadd.f32 %v115, %v232
    %v234 = vpop.f32.mrf.mxu0
    %235 = vmatprep.mubr.f32.mxu0 0.0
    %236 = vmatmul.mubr.f32.gmra.mxu0 %v134
    %v237 = vpop.f32.mrf.mxu0
    %v238 = vadd.f32 %v115, %v237
    %v239 = vpop.f32.mrf.mxu0
    %240 = vmatprep.mubr.f32.mxu0 0.0
    %241 = vmatmul.mubr.f32.gmra.mxu0 %v137
    %v242 = vpop.f32.mrf.mxu0
    %v243 = vadd.f32 %v115, %v242
    %v244 = vpop.f32.mrf.mxu0
    %245 = vmatprep.mubr.f32.mxu0 0.0
    %246 = vmatmul.mubr.f32.gmra.mxu0 %v140
    %v247 = vpop.f32.mrf.mxu0
    %v248 = vadd.f32 %v115, %v247
    %v249 = vpop.f32.mrf.mxu0
    %250 = vdwg.mxu0
    %v251 = vld [vmem:[#allocation12] sm:$0xff]
    %v252 = vld [vmem:[#allocation12 + $0x8] sm:$0xff]
    %v253 = vld [vmem:[#allocation12 + $0x10] sm:$0xff]
    %v254 = vld [vmem:[#allocation12 + $0x18] sm:$0xff]
    %v255 = vld [vmem:[#allocation7] sm:$0xff]
    %v256 = vld [vmem:[#allocation9] sm:$0xff]
    %vm257 = vcmask 261120
    %v259 = vsel %vm257, %v255, 0
    %261 = vmatprep.subr.mxu0 0.0
    %262 = vmatpush1.msra.mxu0 0.0
    %263 = vmatprep.subr.mxu0 0.0
    %264 = vmatpush1.msra.mxu0 0.0
    %265 = vmatprep.subr.mxu0 0.0
    %266 = vmatpush1.msra.mxu0 0.0
    %267 = vmatprep.subr.mxu0 0.0
    %268 = vmatpush1.msra.mxu0 0.0
    %269 = vmatprep.subr.mxu0 0.0
    %270 = vmatpush1.msra.mxu0 0.0
    %271 = vmatprep.subr.mxu0 0.0
    %272 = vmatpush1.msra.mxu0 0.0
    %273 = vmatprep.subr.mxu0 0.0
    %274 = vmatpush1.msra.mxu0 0.0
    %275 = vmatprep.subr.mxu0 0.0
    %276 = vmatpush1.msra.mxu0 0.0
    %277 = vmatprep.subr.mxu0 0.0
    %278 = vmatpush1.msra.mxu0 0.0
    %279 = vmatprep.subr.mxu0 0.0
    %280 = vmatpush1.msra.mxu0 0.0
    %281 = vmatprep.subr.mxu0 0.0
    %282 = vmatpush1.msra.mxu0 0.0
    %283 = vmatprep.subr.mxu0 0.0
    %284 = vmatpush1.msra.mxu0 0.0
    %285 = vmatprep.subr.mxu0 0.0
    %286 = vmatpush1.msra.mxu0 %v254
    %287 = vmatprep.subr.mxu0 0.0
    %288 = vmatpush1.msra.mxu0 %v253
    %289 = vmatprep.subr.mxu0 0.0
    %290 = vmatpush1.msra.mxu0 %v252
    %291 = vmatprep.subr.mxu0 0.0
    %292 = vmatpush1.msra.mxu0 %v251
    %293 = vmatprep.subr.mxu0 0.0
    %294 = vmatpush2.msra.mxu0 0.0
    %295 = vmatprep.subr.mxu0 0.0
    %296 = vmatpush2.msra.mxu0 0.0
    %297 = vmatprep.subr.mxu0 0.0
    %298 = vmatpush2.msra.mxu0 0.0
    %299 = vmatprep.subr.mxu0 0.0
    %300 = vmatpush2.msra.mxu0 0.0
    %301 = vmatprep.subr.mxu0 0.0
    %302 = vmatpush2.msra.mxu0 0.0
    %303 = vmatprep.subr.mxu0 0.0
    %304 = vmatpush2.msra.mxu0 0.0
    %305 = vmatprep.subr.mxu0 0.0
    %306 = vmatpush2.msra.mxu0 0.0
    %307 = vmatprep.subr.mxu0 0.0
    %308 = vmatpush2.msra.mxu0 0.0
    %309 = vmatprep.subr.mxu0 0.0
    %310 = vmatpush2.msra.mxu0 0.0
    %311 = vmatprep.subr.mxu0 0.0
    %312 = vmatpush2.msra.mxu0 0.0
    %313 = vmatprep.subr.mxu0 0.0
    %314 = vmatpush2.msra.mxu0 0.0
    %315 = vmatprep.subr.mxu0 0.0
    %316 = vmatpush2.msra.mxu0 0.0
    %317 = vmatprep.subr.mxu0 0.0
    %318 = vmatpush2.msra.mxu0 0.0
    %319 = vmatprep.subr.mxu0 0.0
    %320 = vmatpush2.msra.mxu0 0.0
    %321 = vmatprep.subr.mxu0 0.0
    %322 = vmatpush2.msra.mxu0 0.0
    %323 = vmatprep.subr.mxu0 0.0
    %324 = vmatpush2.msra.mxu0 0.0
    %325 = vmatprep.mubr.f32.mxu0 0.0
    %326 = vmatmul.mubr.f32.gmra.mxu0 %v259
    %v327 = vpop.f32.mrf.mxu0
    %v328 = vadd.f32 0.0, %v327
    %v329 = vpop.f32.mrf.mxu0
    %330 = vdwg.mxu0
    %v331 = vadd.f32 %v213, %v328
    %v332 = vxor.u32 %v331, 2147483648
    %v333 = vmul.f32 %v332, 1.442695
    %v334 = vpow.pop %v333
    %v335 = vadd.f32 %v334, 1.0
    %v336 = vrcp.pop %v335
    %v337 = vmul.f32 1.0, %v336
    %v338 = vmul.f32 %v337, 2.0
    %v339 = vsub.f32 %v338, 1.0
    %341 = vrot.lane.b32.xlu0 %v256, 32
    %v342 = vpop.permute.xlu0 %341
    %v344 = vmul.f32 %v337, %v342
    %346 = vrot.lane.b32.xlu0 %v339, 64
    %v347 = vpop.permute.xlu0 %346
    %v349 = vmul.f32 %v337, %v347
    %351 = vrot.lane.b32.xlu0 %v349, 32
    %v352 = vpop.permute.xlu0 %351
    %v354 = vadd.f32 %v344, %v352
    %v355 = vtanh.pop %v354
    %357 = vrot.lane.b32.xlu0 %v355, 64
    %v358 = vpop.permute.xlu0 %357
    %v360 = vmul.f32 %v337, %v358
    %362 = vrot.lane.b32.xlu0 %v360, 32
    %v363 = vpop.permute.xlu0 %362
    %365 = vst.msk [vmem:[#allocation2] sm:$0xff] %vm257, %v363
    %v366 = vsel %vm257, %v363, 0
    %368 = vmatprep.subr.mxu0 0.0
    %369 = vmatpush1.msra.mxu0 0.0
    %370 = vmatprep.subr.mxu0 0.0
    %371 = vmatpush1.msra.mxu0 0.0
    %372 = vmatprep.subr.mxu0 0.0
    %373 = vmatpush1.msra.mxu0 0.0
    %374 = vmatprep.subr.mxu0 0.0
    %375 = vmatpush1.msra.mxu0 0.0
    %376 = vmatprep.subr.mxu0 0.0
    %377 = vmatpush1.msra.mxu0 0.0
    %378 = vmatprep.subr.mxu0 0.0
    %379 = vmatpush1.msra.mxu0 0.0
    %380 = vmatprep.subr.mxu0 0.0
    %381 = vmatpush1.msra.mxu0 0.0
    %382 = vmatprep.subr.mxu0 0.0
    %383 = vmatpush1.msra.mxu0 0.0
    %384 = vmatprep.subr.mxu0 0.0
    %385 = vmatpush1.msra.mxu0 0.0
    %386 = vmatprep.subr.mxu0 0.0
    %387 = vmatpush1.msra.mxu0 0.0
    %388 = vmatprep.subr.mxu0 0.0
    %389 = vmatpush1.msra.mxu0 0.0
    %390 = vmatprep.subr.mxu0 0.0
    %391 = vmatpush1.msra.mxu0 0.0
    %392 = vmatprep.subr.mxu0 0.0
    %393 = vmatpush1.msra.mxu0 %v254
    %394 = vmatprep.subr.mxu0 0.0
    %395 = vmatpush1.msra.mxu0 %v253
    %396 = vmatprep.subr.mxu0 0.0
    %397 = vmatpush1.msra.mxu0 %v252
    %398 = vmatprep.subr.mxu0 0.0
    %399 = vmatpush1.msra.mxu0 %v251
    %400 = vmatprep.subr.mxu0 0.0
    %401 = vmatpush2.msra.mxu0 0.0
    %402 = vmatprep.subr.mxu0 0.0
    %403 = vmatpush2.msra.mxu0 0.0
    %404 = vmatprep.subr.mxu0 0.0
    %405 = vmatpush2.msra.mxu0 0.0
    %406 = vmatprep.subr.mxu0 0.0
    %407 = vmatpush2.msra.mxu0 0.0
    %408 = vmatprep.subr.mxu0 0.0
    %409 = vmatpush2.msra.mxu0 0.0
    %410 = vmatprep.subr.mxu0 0.0
    %411 = vmatpush2.msra.mxu0 0.0
    %412 = vmatprep.subr.mxu0 0.0
    %413 = vmatpush2.msra.mxu0 0.0
    %414 = vmatprep.subr.mxu0 0.0
    %415 = vmatpush2.msra.mxu0 0.0
    %416 = vmatprep.subr.mxu0 0.0
    %417 = vmatpush2.msra.mxu0 0.0
    %418 = vmatprep.subr.mxu0 0.0
    %419 = vmatpush2.msra.mxu0 0.0
    %420 = vmatprep.subr.mxu0 0.0
    %421 = vmatpush2.msra.mxu0 0.0
    %422 = vmatprep.subr.mxu0 0.0
    %423 = vmatpush2.msra.mxu0 0.0
    %424 = vmatprep.subr.mxu0 0.0
    %425 = vmatpush2.msra.mxu0 0.0
    %426 = vmatprep.subr.mxu0 0.0
    %427 = vmatpush2.msra.mxu0 0.0
    %428 = vmatprep.subr.mxu0 0.0
    %429 = vmatpush2.msra.mxu0 0.0
    %430 = vmatprep.subr.mxu0 0.0
    %431 = vmatpush2.msra.mxu0 0.0
    %432 = vmatprep.mubr.f32.mxu0 0.0
    %433 = vmatmul.mubr.f32.gmra.mxu0 %v366
    %v434 = vpop.f32.mrf.mxu0
    %v435 = vadd.f32 0.0, %v434
    %v436 = vpop.f32.mrf.mxu0
    %437 = vdwg.mxu0
    %v438 = vadd.f32 %v218, %v435
    %v439 = vxor.u32 %v438, 2147483648
    %v440 = vmul.f32 %v439, 1.442695
    %v441 = vpow.pop %v440
    %v442 = vadd.f32 %v441, 1.0
    %v443 = vrcp.pop %v442
    %v444 = vmul.f32 1.0, %v443
    %v445 = vmul.f32 %v444, 2.0
    %v446 = vsub.f32 %v445, 1.0
    %v447 = vmul.f32 %v444, %v354
    %449 = vrot.lane.b32.xlu0 %v446, 64
    %v450 = vpop.permute.xlu0 %449
    %v452 = vmul.f32 %v444, %v450
    %454 = vrot.lane.b32.xlu0 %v452, 32
    %v455 = vpop.permute.xlu0 %454
    %v457 = vadd.f32 %v447, %v455
    %v458 = vtanh.pop %v457
    %460 = vrot.lane.b32.xlu0 %v458, 64
    %v461 = vpop.permute.xlu0 %460
    %v463 = vmul.f32 %v444, %v461
    %465 = vrot.lane.b32.xlu0 %v463, 32
    %v466 = vpop.permute.xlu0 %465
    %s468 = scalar_lea.vmem [#allocation2], 8
    %469 = vst.msk [vmem:[%s468] sm:$0xff] %vm257, %v466
    %v470 = vsel %vm257, %v466, 0
    %472 = vmatprep.subr.mxu0 0.0
    %473 = vmatpush1.msra.mxu0 0.0
    %474 = vmatprep.subr.mxu0 0.0
    %475 = vmatpush1.msra.mxu0 0.0
    %476 = vmatprep.subr.mxu0 0.0
    %477 = vmatpush1.msra.mxu0 0.0
    %478 = vmatprep.subr.mxu0 0.0
    %479 = vmatpush1.msra.mxu0 0.0
    %480 = vmatprep.subr.mxu0 0.0
    %481 = vmatpush1.msra.mxu0 0.0
    %482 = vmatprep.subr.mxu0 0.0
    %483 = vmatpush1.msra.mxu0 0.0
    %484 = vmatprep.subr.mxu0 0.0
    %485 = vmatpush1.msra.mxu0 0.0
    %486 = vmatprep.subr.mxu0 0.0
    %487 = vmatpush1.msra.mxu0 0.0
    %488 = vmatprep.subr.mxu0 0.0
    %489 = vmatpush1.msra.mxu0 0.0
    %490 = vmatprep.subr.mxu0 0.0
    %491 = vmatpush1.msra.mxu0 0.0
    %492 = vmatprep.subr.mxu0 0.0
    %493 = vmatpush1.msra.mxu0 0.0
    %494 = vmatprep.subr.mxu0 0.0
    %495 = vmatpush1.msra.mxu0 0.0
    %496 = vmatprep.subr.mxu0 0.0
    %497 = vmatpush1.msra.mxu0 %v254
    %498 = vmatprep.subr.mxu0 0.0
    %499 = vmatpush1.msra.mxu0 %v253
    %500 = vmatprep.subr.mxu0 0.0
    %501 = vmatpush1.msra.mxu0 %v252
    %502 = vmatprep.subr.mxu0 0.0
    %503 = vmatpush1.msra.mxu0 %v251
    %504 = vmatprep.subr.mxu0 0.0
    %505 = vmatpush2.msra.mxu0 0.0
    %506 = vmatprep.subr.mxu0 0.0
    %507 = vmatpush2.msra.mxu0 0.0
    %508 = vmatprep.subr.mxu0 0.0
    %509 = vmatpush2.msra.mxu0 0.0
    %510 = vmatprep.subr.mxu0 0.0
    %511 = vmatpush2.msra.mxu0 0.0
    %512 = vmatprep.subr.mxu0 0.0
    %513 = vmatpush2.msra.mxu0 0.0
    %514 = vmatprep.subr.mxu0 0.0
    %515 = vmatpush2.msra.mxu0 0.0
    %516 = vmatprep.subr.mxu0 0.0
    %517 = vmatpush2.msra.mxu0 0.0
    %518 = vmatprep.subr.mxu0 0.0
    %519 = vmatpush2.msra.mxu0 0.0
    %520 = vmatprep.subr.mxu0 0.0
    %521 = vmatpush2.msra.mxu0 0.0
    %522 = vmatprep.subr.mxu0 0.0
    %523 = vmatpush2.msra.mxu0 0.0
    %524 = vmatprep.subr.mxu0 0.0
    %525 = vmatpush2.msra.mxu0 0.0
    %526 = vmatprep.subr.mxu0 0.0
    %527 = vmatpush2.msra.mxu0 0.0
    %528 = vmatprep.subr.mxu0 0.0
    %529 = vmatpush2.msra.mxu0 0.0
    %530 = vmatprep.subr.mxu0 0.0
    %531 = vmatpush2.msra.mxu0 0.0
    %532 = vmatprep.subr.mxu0 0.0
    %533 = vmatpush2.msra.mxu0 0.0
    %534 = vmatprep.subr.mxu0 0.0
    %535 = vmatpush2.msra.mxu0 0.0
    %536 = vmatprep.mubr.f32.mxu0 0.0
    %537 = vmatmul.mubr.f32.gmra.mxu0 %v470
    %v538 = vpop.f32.mrf.mxu0
    %v539 = vadd.f32 0.0, %v538
    %v540 = vpop.f32.mrf.mxu0
    %541 = vdwg.mxu0
    %v542 = vadd.f32 %v223, %v539
    %v543 = vxor.u32 %v542, 2147483648
    %v544 = vmul.f32 %v543, 1.442695
    %v545 = vpow.pop %v544
    %v546 = vadd.f32 %v545, 1.0
    %v547 = vrcp.pop %v546
    %v548 = vmul.f32 1.0, %v547
    %v549 = vmul.f32 %v548, 2.0
    %v550 = vsub.f32 %v549, 1.0
    %v551 = vmul.f32 %v548, %v457
    %553 = vrot.lane.b32.xlu0 %v550, 64
    %v554 = vpop.permute.xlu0 %553
    %v556 = vmul.f32 %v548, %v554
    %558 = vrot.lane.b32.xlu0 %v556, 32
    %v559 = vpop.permute.xlu0 %558
    %v561 = vadd.f32 %v551, %v559
    %v562 = vtanh.pop %v561
    %564 = vrot.lane.b32.xlu0 %v562, 64
    %v565 = vpop.permute.xlu0 %564
    %v567 = vmul.f32 %v548, %v565
    %569 = vrot.lane.b32.xlu0 %v567, 32
    %v570 = vpop.permute.xlu0 %569
    %s572 = scalar_lea.vmem [#allocation2], 16
    %573 = vst.msk [vmem:[%s572] sm:$0xff] %vm257, %v570
    %v574 = vsel %vm257, %v570, 0
    %576 = vmatprep.subr.mxu0 0.0
    %577 = vmatpush1.msra.mxu0 0.0
    %578 = vmatprep.subr.mxu0 0.0
    %579 = vmatpush1.msra.mxu0 0.0
    %580 = vmatprep.subr.mxu0 0.0
    %581 = vmatpush1.msra.mxu0 0.0
    %582 = vmatprep.subr.mxu0 0.0
    %583 = vmatpush1.msra.mxu0 0.0
    %584 = vmatprep.subr.mxu0 0.0
    %585 = vmatpush1.msra.mxu0 0.0
    %586 = vmatprep.subr.mxu0 0.0
    %587 = vmatpush1.msra.mxu0 0.0
    %588 = vmatprep.subr.mxu0 0.0
    %589 = vmatpush1.msra.mxu0 0.0
    %590 = vmatprep.subr.mxu0 0.0
    %591 = vmatpush1.msra.mxu0 0.0
    %592 = vmatprep.subr.mxu0 0.0
    %593 = vmatpush1.msra.mxu0 0.0
    %594 = vmatprep.subr.mxu0 0.0
    %595 = vmatpush1.msra.mxu0 0.0
    %596 = vmatprep.subr.mxu0 0.0
    %597 = vmatpush1.msra.mxu0 0.0
    %598 = vmatprep.subr.mxu0 0.0
    %599 = vmatpush1.msra.mxu0 0.0
    %600 = vmatprep.subr.mxu0 0.0
    %601 = vmatpush1.msra.mxu0 %v254
    %602 = vmatprep.subr.mxu0 0.0
    %603 = vmatpush1.msra.mxu0 %v253
    %604 = vmatprep.subr.mxu0 0.0
    %605 = vmatpush1.msra.mxu0 %v252
    %606 = vmatprep.subr.mxu0 0.0
    %607 = vmatpush1.msra.mxu0 %v251
    %608 = vmatprep.subr.mxu0 0.0
    %609 = vmatpush2.msra.mxu0 0.0
    %610 = vmatprep.subr.mxu0 0.0
    %611 = vmatpush2.msra.mxu0 0.0
    %612 = vmatprep.subr.mxu0 0.0
    %613 = vmatpush2.msra.mxu0 0.0
    %614 = vmatprep.subr.mxu0 0.0
    %615 = vmatpush2.msra.mxu0 0.0
    %616 = vmatprep.subr.mxu0 0.0
    %617 = vmatpush2.msra.mxu0 0.0
    %618 = vmatprep.subr.mxu0 0.0
    %619 = vmatpush2.msra.mxu0 0.0
    %620 = vmatprep.subr.mxu0 0.0
    %621 = vmatpush2.msra.mxu0 0.0
    %622 = vmatprep.subr.mxu0 0.0
    %623 = vmatpush2.msra.mxu0 0.0
    %624 = vmatprep.subr.mxu0 0.0
    %625 = vmatpush2.msra.mxu0 0.0
    %626 = vmatprep.subr.mxu0 0.0
    %627 = vmatpush2.msra.mxu0 0.0
    %628 = vmatprep.subr.mxu0 0.0
    %629 = vmatpush2.msra.mxu0 0.0
    %630 = vmatprep.subr.mxu0 0.0
    %631 = vmatpush2.msra.mxu0 0.0
    %632 = vmatprep.subr.mxu0 0.0
    %633 = vmatpush2.msra.mxu0 0.0
    %634 = vmatprep.subr.mxu0 0.0
    %635 = vmatpush2.msra.mxu0 0.0
    %636 = vmatprep.subr.mxu0 0.0
    %637 = vmatpush2.msra.mxu0 0.0
    %638 = vmatprep.subr.mxu0 0.0
    %639 = vmatpush2.msra.mxu0 0.0
    %640 = vmatprep.mubr.f32.mxu0 0.0
    %641 = vmatmul.mubr.f32.gmra.mxu0 %v574
    %v642 = vpop.f32.mrf.mxu0
    %v643 = vadd.f32 0.0, %v642
    %v644 = vpop.f32.mrf.mxu0
    %645 = vdwg.mxu0
    %v646 = vadd.f32 %v228, %v643
    %v647 = vxor.u32 %v646, 2147483648
    %v648 = vmul.f32 %v647, 1.442695
    %v649 = vpow.pop %v648
    %v650 = vadd.f32 %v649, 1.0
    %v651 = vrcp.pop %v650
    %v652 = vmul.f32 1.0, %v651
    %v653 = vmul.f32 %v652, 2.0
    %v654 = vsub.f32 %v653, 1.0
    %v655 = vmul.f32 %v652, %v561
    %657 = vrot.lane.b32.xlu0 %v654, 64
    %v658 = vpop.permute.xlu0 %657
    %v660 = vmul.f32 %v652, %v658
    %662 = vrot.lane.b32.xlu0 %v660, 32
    %v663 = vpop.permute.xlu0 %662
    %v665 = vadd.f32 %v655, %v663
    %v666 = vtanh.pop %v665
    %668 = vrot.lane.b32.xlu0 %v666, 64
    %v669 = vpop.permute.xlu0 %668
    %v671 = vmul.f32 %v652, %v669
    %673 = vrot.lane.b32.xlu0 %v671, 32
    %v674 = vpop.permute.xlu0 %673
    %s676 = scalar_lea.vmem [#allocation2], 24
    %677 = vst.msk [vmem:[%s676] sm:$0xff] %vm257, %v674
    %v678 = vsel %vm257, %v674, 0
    %680 = vmatprep.subr.mxu0 0.0
    %681 = vmatpush1.msra.mxu0 0.0
    %682 = vmatprep.subr.mxu0 0.0
    %683 = vmatpush1.msra.mxu0 0.0
    %684 = vmatprep.subr.mxu0 0.0
    %685 = vmatpush1.msra.mxu0 0.0
    %686 = vmatprep.subr.mxu0 0.0
    %687 = vmatpush1.msra.mxu0 0.0
    %688 = vmatprep.subr.mxu0 0.0
    %689 = vmatpush1.msra.mxu0 0.0
    %690 = vmatprep.subr.mxu0 0.0
    %691 = vmatpush1.msra.mxu0 0.0
    %692 = vmatprep.subr.mxu0 0.0
    %693 = vmatpush1.msra.mxu0 0.0
    %694 = vmatprep.subr.mxu0 0.0
    %695 = vmatpush1.msra.mxu0 0.0
    %696 = vmatprep.subr.mxu0 0.0
    %697 = vmatpush1.msra.mxu0 0.0
    %698 = vmatprep.subr.mxu0 0.0
    %699 = vmatpush1.msra.mxu0 0.0
    %700 = vmatprep.subr.mxu0 0.0
    %701 = vmatpush1.msra.mxu0 0.0
    %702 = vmatprep.subr.mxu0 0.0
    %703 = vmatpush1.msra.mxu0 0.0
    %704 = vmatprep.subr.mxu0 0.0
    %705 = vmatpush1.msra.mxu0 %v254
    %706 = vmatprep.subr.mxu0 0.0
    %707 = vmatpush1.msra.mxu0 %v253
    %708 = vmatprep.subr.mxu0 0.0
    %709 = vmatpush1.msra.mxu0 %v252
    %710 = vmatprep.subr.mxu0 0.0
    %711 = vmatpush1.msra.mxu0 %v251
    %712 = vmatprep.subr.mxu0 0.0
    %713 = vmatpush2.msra.mxu0 0.0
    %714 = vmatprep.subr.mxu0 0.0
    %715 = vmatpush2.msra.mxu0 0.0
    %716 = vmatprep.subr.mxu0 0.0
    %717 = vmatpush2.msra.mxu0 0.0
    %718 = vmatprep.subr.mxu0 0.0
    %719 = vmatpush2.msra.mxu0 0.0
    %720 = vmatprep.subr.mxu0 0.0
    %721 = vmatpush2.msra.mxu0 0.0
    %722 = vmatprep.subr.mxu0 0.0
    %723 = vmatpush2.msra.mxu0 0.0
    %724 = vmatprep.subr.mxu0 0.0
    %725 = vmatpush2.msra.mxu0 0.0
    %726 = vmatprep.subr.mxu0 0.0
    %727 = vmatpush2.msra.mxu0 0.0
    %728 = vmatprep.subr.mxu0 0.0
    %729 = vmatpush2.msra.mxu0 0.0
    %730 = vmatprep.subr.mxu0 0.0
    %731 = vmatpush2.msra.mxu0 0.0
    %732 = vmatprep.subr.mxu0 0.0
    %733 = vmatpush2.msra.mxu0 0.0
    %734 = vmatprep.subr.mxu0 0.0
    %735 = vmatpush2.msra.mxu0 0.0
    %736 = vmatprep.subr.mxu0 0.0
    %737 = vmatpush2.msra.mxu0 0.0
    %738 = vmatprep.subr.mxu0 0.0
    %739 = vmatpush2.msra.mxu0 0.0
    %740 = vmatprep.subr.mxu0 0.0
    %741 = vmatpush2.msra.mxu0 0.0
    %742 = vmatprep.subr.mxu0 0.0
    %743 = vmatpush2.msra.mxu0 0.0
    %744 = vmatprep.mubr.f32.mxu0 0.0
    %745 = vmatmul.mubr.f32.gmra.mxu0 %v678
    %v746 = vpop.f32.mrf.mxu0
    %v747 = vadd.f32 0.0, %v746
    %v748 = vpop.f32.mrf.mxu0
    %749 = vdwg.mxu0
    %v750 = vadd.f32 %v233, %v747
    %v751 = vxor.u32 %v750, 2147483648
    %v752 = vmul.f32 %v751, 1.442695
    %v753 = vpow.pop %v752
    %v754 = vadd.f32 %v753, 1.0
    %v755 = vrcp.pop %v754
    %v756 = vmul.f32 1.0, %v755
    %v757 = vmul.f32 %v756, 2.0
    %v758 = vsub.f32 %v757, 1.0
    %v759 = vmul.f32 %v756, %v665
    %761 = vrot.lane.b32.xlu0 %v758, 64
    %v762 = vpop.permute.xlu0 %761
    %v764 = vmul.f32 %v756, %v762
    %766 = vrot.lane.b32.xlu0 %v764, 32
    %v767 = vpop.permute.xlu0 %766
    %v769 = vadd.f32 %v759, %v767
    %v770 = vtanh.pop %v769
    %772 = vrot.lane.b32.xlu0 %v770, 64
    %v773 = vpop.permute.xlu0 %772
    %v775 = vmul.f32 %v756, %v773
    %777 = vrot.lane.b32.xlu0 %v775, 32
    %v778 = vpop.permute.xlu0 %777
    %s780 = scalar_lea.vmem [#allocation2], 32
    %781 = vst.msk [vmem:[%s780] sm:$0xff] %vm257, %v778
    %v782 = vsel %vm257, %v778, 0
    %784 = vmatprep.subr.mxu0 0.0
    %785 = vmatpush1.msra.mxu0 0.0
    %786 = vmatprep.subr.mxu0 0.0
    %787 = vmatpush1.msra.mxu0 0.0
    %788 = vmatprep.subr.mxu0 0.0
    %789 = vmatpush1.msra.mxu0 0.0
    %790 = vmatprep.subr.mxu0 0.0
    %791 = vmatpush1.msra.mxu0 0.0
    %792 = vmatprep.subr.mxu0 0.0
    %793 = vmatpush1.msra.mxu0 0.0
    %794 = vmatprep.subr.mxu0 0.0
    %795 = vmatpush1.msra.mxu0 0.0
    %796 = vmatprep.subr.mxu0 0.0
    %797 = vmatpush1.msra.mxu0 0.0
    %798 = vmatprep.subr.mxu0 0.0
    %799 = vmatpush1.msra.mxu0 0.0
    %800 = vmatprep.subr.mxu0 0.0
    %801 = vmatpush1.msra.mxu0 0.0
    %802 = vmatprep.subr.mxu0 0.0
    %803 = vmatpush1.msra.mxu0 0.0
    %804 = vmatprep.subr.mxu0 0.0
    %805 = vmatpush1.msra.mxu0 0.0
    %806 = vmatprep.subr.mxu0 0.0
    %807 = vmatpush1.msra.mxu0 0.0
    %808 = vmatprep.subr.mxu0 0.0
    %809 = vmatpush1.msra.mxu0 %v254
    %810 = vmatprep.subr.mxu0 0.0
    %811 = vmatpush1.msra.mxu0 %v253
    %812 = vmatprep.subr.mxu0 0.0
    %813 = vmatpush1.msra.mxu0 %v252
    %814 = vmatprep.subr.mxu0 0.0
    %815 = vmatpush1.msra.mxu0 %v251
    %816 = vmatprep.subr.mxu0 0.0
    %817 = vmatpush2.msra.mxu0 0.0
    %818 = vmatprep.subr.mxu0 0.0
    %819 = vmatpush2.msra.mxu0 0.0
    %820 = vmatprep.subr.mxu0 0.0
    %821 = vmatpush2.msra.mxu0 0.0
    %822 = vmatprep.subr.mxu0 0.0
    %823 = vmatpush2.msra.mxu0 0.0
    %824 = vmatprep.subr.mxu0 0.0
    %825 = vmatpush2.msra.mxu0 0.0
    %826 = vmatprep.subr.mxu0 0.0
    %827 = vmatpush2.msra.mxu0 0.0
    %828 = vmatprep.subr.mxu0 0.0
    %829 = vmatpush2.msra.mxu0 0.0
    %830 = vmatprep.subr.mxu0 0.0
    %831 = vmatpush2.msra.mxu0 0.0
    %832 = vmatprep.subr.mxu0 0.0
    %833 = vmatpush2.msra.mxu0 0.0
    %834 = vmatprep.subr.mxu0 0.0
    %835 = vmatpush2.msra.mxu0 0.0
    %836 = vmatprep.subr.mxu0 0.0
    %837 = vmatpush2.msra.mxu0 0.0
    %838 = vmatprep.subr.mxu0 0.0
    %839 = vmatpush2.msra.mxu0 0.0
    %840 = vmatprep.subr.mxu0 0.0
    %841 = vmatpush2.msra.mxu0 0.0
    %842 = vmatprep.subr.mxu0 0.0
    %843 = vmatpush2.msra.mxu0 0.0
    %844 = vmatprep.subr.mxu0 0.0
    %845 = vmatpush2.msra.mxu0 0.0
    %846 = vmatprep.subr.mxu0 0.0
    %847 = vmatpush2.msra.mxu0 0.0
    %848 = vmatprep.mubr.f32.mxu0 0.0
    %849 = vmatmul.mubr.f32.gmra.mxu0 %v782
    %v850 = vpop.f32.mrf.mxu0
    %v851 = vadd.f32 0.0, %v850
    %v852 = vpop.f32.mrf.mxu0
    %853 = vdwg.mxu0
    %v854 = vadd.f32 %v238, %v851
    %v855 = vxor.u32 %v854, 2147483648
    %v856 = vmul.f32 %v855, 1.442695
    %v857 = vpow.pop %v856
    %v858 = vadd.f32 %v857, 1.0
    %v859 = vrcp.pop %v858
    %v860 = vmul.f32 1.0, %v859
    %v861 = vmul.f32 %v860, 2.0
    %v862 = vsub.f32 %v861, 1.0
    %v863 = vmul.f32 %v860, %v769
    %865 = vrot.lane.b32.xlu0 %v862, 64
    %v866 = vpop.permute.xlu0 %865
    %v868 = vmul.f32 %v860, %v866
    %870 = vrot.lane.b32.xlu0 %v868, 32
    %v871 = vpop.permute.xlu0 %870
    %v873 = vadd.f32 %v863, %v871
    %v874 = vtanh.pop %v873
    %876 = vrot.lane.b32.xlu0 %v874, 64
    %v877 = vpop.permute.xlu0 %876
    %v879 = vmul.f32 %v860, %v877
    %881 = vrot.lane.b32.xlu0 %v879, 32
    %v882 = vpop.permute.xlu0 %881
    %s884 = scalar_lea.vmem [#allocation2], 40
    %885 = vst.msk [vmem:[%s884] sm:$0xff] %vm257, %v882
    %v886 = vsel %vm257, %v882, 0
    %888 = vmatprep.subr.mxu0 0.0
    %889 = vmatpush1.msra.mxu0 0.0
    %890 = vmatprep.subr.mxu0 0.0
    %891 = vmatpush1.msra.mxu0 0.0
    %892 = vmatprep.subr.mxu0 0.0
    %893 = vmatpush1.msra.mxu0 0.0
    %894 = vmatprep.subr.mxu0 0.0
    %895 = vmatpush1.msra.mxu0 0.0
    %896 = vmatprep.subr.mxu0 0.0
    %897 = vmatpush1.msra.mxu0 0.0
    %898 = vmatprep.subr.mxu0 0.0
    %899 = vmatpush1.msra.mxu0 0.0
    %900 = vmatprep.subr.mxu0 0.0
    %901 = vmatpush1.msra.mxu0 0.0
    %902 = vmatprep.subr.mxu0 0.0
    %903 = vmatpush1.msra.mxu0 0.0
    %904 = vmatprep.subr.mxu0 0.0
    %905 = vmatpush1.msra.mxu0 0.0
    %906 = vmatprep.subr.mxu0 0.0
    %907 = vmatpush1.msra.mxu0 0.0
    %908 = vmatprep.subr.mxu0 0.0
    %909 = vmatpush1.msra.mxu0 0.0
    %910 = vmatprep.subr.mxu0 0.0
    %911 = vmatpush1.msra.mxu0 0.0
    %912 = vmatprep.subr.mxu0 0.0
    %913 = vmatpush1.msra.mxu0 %v254
    %914 = vmatprep.subr.mxu0 0.0
    %915 = vmatpush1.msra.mxu0 %v253
    %916 = vmatprep.subr.mxu0 0.0
    %917 = vmatpush1.msra.mxu0 %v252
    %918 = vmatprep.subr.mxu0 0.0
    %919 = vmatpush1.msra.mxu0 %v251
    %920 = vmatprep.subr.mxu0 0.0
    %921 = vmatpush2.msra.mxu0 0.0
    %922 = vmatprep.subr.mxu0 0.0
    %923 = vmatpush2.msra.mxu0 0.0
    %924 = vmatprep.subr.mxu0 0.0
    %925 = vmatpush2.msra.mxu0 0.0
    %926 = vmatprep.subr.mxu0 0.0
    %927 = vmatpush2.msra.mxu0 0.0
    %928 = vmatprep.subr.mxu0 0.0
    %929 = vmatpush2.msra.mxu0 0.0
    %930 = vmatprep.subr.mxu0 0.0
    %931 = vmatpush2.msra.mxu0 0.0
    %932 = vmatprep.subr.mxu0 0.0
    %933 = vmatpush2.msra.mxu0 0.0
    %934 = vmatprep.subr.mxu0 0.0
    %935 = vmatpush2.msra.mxu0 0.0
    %936 = vmatprep.subr.mxu0 0.0
    %937 = vmatpush2.msra.mxu0 0.0
    %938 = vmatprep.subr.mxu0 0.0
    %939 = vmatpush2.msra.mxu0 0.0
    %940 = vmatprep.subr.mxu0 0.0
    %941 = vmatpush2.msra.mxu0 0.0
    %942 = vmatprep.subr.mxu0 0.0
    %943 = vmatpush2.msra.mxu0 0.0
    %944 = vmatprep.subr.mxu0 0.0
    %945 = vmatpush2.msra.mxu0 0.0
    %946 = vmatprep.subr.mxu0 0.0
    %947 = vmatpush2.msra.mxu0 0.0
    %948 = vmatprep.subr.mxu0 0.0
    %949 = vmatpush2.msra.mxu0 0.0
    %950 = vmatprep.subr.mxu0 0.0
    %951 = vmatpush2.msra.mxu0 0.0
    %952 = vmatprep.mubr.f32.mxu0 0.0
    %953 = vmatmul.mubr.f32.gmra.mxu0 %v886
    %v954 = vpop.f32.mrf.mxu0
    %v955 = vadd.f32 0.0, %v954
    %v956 = vpop.f32.mrf.mxu0
    %957 = vdwg.mxu0
    %v958 = vadd.f32 %v243, %v955
    %v959 = vxor.u32 %v958, 2147483648
    %v960 = vmul.f32 %v959, 1.442695
    %v961 = vpow.pop %v960
    %v962 = vadd.f32 %v961, 1.0
    %v963 = vrcp.pop %v962
    %v964 = vmul.f32 1.0, %v963
    %v965 = vmul.f32 %v964, 2.0
    %v966 = vsub.f32 %v965, 1.0
    %v967 = vmul.f32 %v964, %v873
    %969 = vrot.lane.b32.xlu0 %v966, 64
    %v970 = vpop.permute.xlu0 %969
    %v972 = vmul.f32 %v964, %v970
    %974 = vrot.lane.b32.xlu0 %v972, 32
    %v975 = vpop.permute.xlu0 %974
    %v977 = vadd.f32 %v967, %v975
    %v978 = vtanh.pop %v977
    %980 = vrot.lane.b32.xlu0 %v978, 64
    %v981 = vpop.permute.xlu0 %980
    %v983 = vmul.f32 %v964, %v981
    %985 = vrot.lane.b32.xlu0 %v983, 32
    %v986 = vpop.permute.xlu0 %985
    %s988 = scalar_lea.vmem [#allocation2], 48
    %989 = vst.msk [vmem:[%s988] sm:$0xff] %vm257, %v986
    %v990 = vsel %vm257, %v986, 0
    %992 = vmatprep.subr.mxu0 0.0
    %993 = vmatpush1.msra.mxu0 0.0
    %994 = vmatprep.subr.mxu0 0.0
    %995 = vmatpush1.msra.mxu0 0.0
    %996 = vmatprep.subr.mxu0 0.0
    %997 = vmatpush1.msra.mxu0 0.0
    %998 = vmatprep.subr.mxu0 0.0
    %999 = vmatpush1.msra.mxu0 0.0
    %1000 = vmatprep.subr.mxu0 0.0
    %1001 = vmatpush1.msra.mxu0 0.0
    %1002 = vmatprep.subr.mxu0 0.0
    %1003 = vmatpush1.msra.mxu0 0.0
    %1004 = vmatprep.subr.mxu0 0.0
    %1005 = vmatpush1.msra.mxu0 0.0
    %1006 = vmatprep.subr.mxu0 0.0
    %1007 = vmatpush1.msra.mxu0 0.0
    %1008 = vmatprep.subr.mxu0 0.0
    %1009 = vmatpush1.msra.mxu0 0.0
    %1010 = vmatprep.subr.mxu0 0.0
    %1011 = vmatpush1.msra.mxu0 0.0
    %1012 = vmatprep.subr.mxu0 0.0
    %1013 = vmatpush1.msra.mxu0 0.0
    %1014 = vmatprep.subr.mxu0 0.0
    %1015 = vmatpush1.msra.mxu0 0.0
    %1016 = vmatprep.subr.mxu0 0.0
    %1017 = vmatpush1.msra.mxu0 %v254
    %1018 = vmatprep.subr.mxu0 0.0
    %1019 = vmatpush1.msra.mxu0 %v253
    %1020 = vmatprep.subr.mxu0 0.0
    %1021 = vmatpush1.msra.mxu0 %v252
    %1022 = vmatprep.subr.mxu0 0.0
    %1023 = vmatpush1.msra.mxu0 %v251
    %1024 = vmatprep.subr.mxu0 0.0
    %1025 = vmatpush2.msra.mxu0 0.0
    %1026 = vmatprep.subr.mxu0 0.0
    %1027 = vmatpush2.msra.mxu0 0.0
    %1028 = vmatprep.subr.mxu0 0.0
    %1029 = vmatpush2.msra.mxu0 0.0
    %1030 = vmatprep.subr.mxu0 0.0
    %1031 = vmatpush2.msra.mxu0 0.0
    %1032 = vmatprep.subr.mxu0 0.0
    %1033 = vmatpush2.msra.mxu0 0.0
    %1034 = vmatprep.subr.mxu0 0.0
    %1035 = vmatpush2.msra.mxu0 0.0
    %1036 = vmatprep.subr.mxu0 0.0
    %1037 = vmatpush2.msra.mxu0 0.0
    %1038 = vmatprep.subr.mxu0 0.0
    %1039 = vmatpush2.msra.mxu0 0.0
    %1040 = vmatprep.subr.mxu0 0.0
    %1041 = vmatpush2.msra.mxu0 0.0
    %1042 = vmatprep.subr.mxu0 0.0
    %1043 = vmatpush2.msra.mxu0 0.0
    %1044 = vmatprep.subr.mxu0 0.0
    %1045 = vmatpush2.msra.mxu0 0.0
    %1046 = vmatprep.subr.mxu0 0.0
    %1047 = vmatpush2.msra.mxu0 0.0
    %1048 = vmatprep.subr.mxu0 0.0
    %1049 = vmatpush2.msra.mxu0 0.0
    %1050 = vmatprep.subr.mxu0 0.0
    %1051 = vmatpush2.msra.mxu0 0.0
    %1052 = vmatprep.subr.mxu0 0.0
    %1053 = vmatpush2.msra.mxu0 0.0
    %1054 = vmatprep.subr.mxu0 0.0
    %1055 = vmatpush2.msra.mxu0 0.0
    %1056 = vmatprep.mubr.f32.mxu0 0.0
    %1057 = vmatmul.mubr.f32.gmra.mxu0 %v990
    %v1058 = vpop.f32.mrf.mxu0
    %v1059 = vadd.f32 0.0, %v1058
    %v1060 = vpop.f32.mrf.mxu0
    %1061 = vdwg.mxu0
    %v1062 = vadd.f32 %v248, %v1059
    %v1063 = vxor.u32 %v1062, 2147483648
    %v1064 = vmul.f32 %v1063, 1.442695
    %v1065 = vpow.pop %v1064
    %v1066 = vadd.f32 %v1065, 1.0
    %v1067 = vrcp.pop %v1066
    %v1068 = vmul.f32 1.0, %v1067
    %v1069 = vmul.f32 %v1068, 2.0
    %v1070 = vsub.f32 %v1069, 1.0
    %v1071 = vmul.f32 %v1068, %v977
    %1073 = vrot.lane.b32.xlu0 %v1070, 64
    %v1074 = vpop.permute.xlu0 %1073
    %v1076 = vmul.f32 %v1068, %v1074
    %1078 = vrot.lane.b32.xlu0 %v1076, 32
    %v1079 = vpop.permute.xlu0 %1078
    %v1081 = vadd.f32 %v1071, %v1079
    %v1082 = vtanh.pop %v1081
    %1084 = vrot.lane.b32.xlu0 %v1082, 64
    %v1085 = vpop.permute.xlu0 %1084
    %v1087 = vmul.f32 %v1068, %v1085
    %1089 = vrot.lane.b32.xlu0 %v1087, 32
    %v1090 = vpop.permute.xlu0 %1089
    %s1092 = scalar_lea.vmem [#allocation2], 56
    %1093 = vst.msk [vmem:[%s1092] sm:$0xff] %vm257, %v1090
    %1094 = vst.msk [vmem:[#allocation13] sm:$0xff] %vm257, %v1090
    %1096 = vrot.lane.b32.xlu0 %v1081, 96
    %v1097 = vpop.permute.xlu0 %1096
    %1099 = vst.msk [vmem:[#allocation14] sm:$0xff] %vm257, %v1097
    %v1100 = vld [vmem:[#allocation2] sm:$0xff]
    %v1101 = vld [vmem:[#allocation2 + $0x8] sm:$0xff]
    %v1102 = vld [vmem:[#allocation2 + $0x10] sm:$0xff]
    %v1103 = vld [vmem:[#allocation2 + $0x18] sm:$0xff]
    %v1104 = vld [vmem:[#allocation2 + $0x20] sm:$0xff]
    %v1105 = vld [vmem:[#allocation2 + $0x28] sm:$0xff]
    %v1106 = vld [vmem:[#allocation2 + $0x30] sm:$0xff]
    %v1107 = vld [vmem:[#allocation2 + $0x38] sm:$0xff]
    %v1108 = vld [vmem:[%s6] sm:$0x1]
    %v1110 = vlaneseq
    %v1111 = vshrl.u32 %v1110, 7
    %v1112 = vsub.s32 0, %v1111
    %v1113 = vrot.slane %v1108, %v1112
    %v1115 = vmul.f32 %v1100, %v1113
    %v1116 = vmul.f32 %v1101, %v1113
    %v1117 = vmul.f32 %v1102, %v1113
    %v1118 = vmul.f32 %v1103, %v1113
    %v1119 = vmul.f32 %v1104, %v1113
    %v1120 = vmul.f32 %v1105, %v1113
    %v1121 = vmul.f32 %v1106, %v1113
    %v1122 = vmul.f32 %v1107, %v1113
    %v1123 = vsel %vm257, %v1115, 0.0
    %1124 = vadd.xlane.f32.xlu0 %v1123
    %v1125 = vpop.xlane.xlu0 %1124
    %v1126 = vsel %vm257, %v1116, 0.0
    %1127 = vadd.xlane.f32.xlu0 %v1126
    %v1128 = vpop.xlane.xlu0 %1127
    %v1129 = vsel %vm257, %v1117, 0.0
    %1130 = vadd.xlane.f32.xlu0 %v1129
    %v1131 = vpop.xlane.xlu0 %1130
    %v1132 = vsel %vm257, %v1118, 0.0
    %1133 = vadd.xlane.f32.xlu0 %v1132
    %v1134 = vpop.xlane.xlu0 %1133
    %v1135 = vsel %vm257, %v1119, 0.0
    %1136 = vadd.xlane.f32.xlu0 %v1135
    %v1137 = vpop.xlane.xlu0 %1136
    %v1138 = vsel %vm257, %v1120, 0.0
    %1139 = vadd.xlane.f32.xlu0 %v1138
    %v1140 = vpop.xlane.xlu0 %1139
    %v1141 = vsel %vm257, %v1121, 0.0
    %1142 = vadd.xlane.f32.xlu0 %v1141
    %v1143 = vpop.xlane.xlu0 %1142
    %v1144 = vsel %vm257, %v1122, 0.0
    %1145 = vadd.xlane.f32.xlu0 %v1144
    %v1146 = vpop.xlane.xlu0 %1145
    %s1147 = sld [smem:[#allocation3]]
    %v1148 = vstv %s1147
    %v1149 = vadd.f32 %v1125, %v1148
    %v1150 = vadd.f32 %v1128, %v1148
    %v1151 = vadd.f32 %v1131, %v1148
    %v1152 = vadd.f32 %v1134, %v1148
    %v1153 = vadd.f32 %v1137, %v1148
    %v1154 = vadd.f32 %v1140, %v1148
    %v1155 = vadd.f32 %v1143, %v1148
    %v1156 = vadd.f32 %v1146, %v1148
    %vm1157 = vcmask 7168
    %1158 = vst.msk [vmem:[%s8] sm:$0xff] %vm1157, %v1149
    %1159 = vst.msk [vmem:[%s8 + $0x8] sm:$0xff] %vm1157, %v1150
    %1160 = vst.msk [vmem:[%s8 + $0x10] sm:$0xff] %vm1157, %v1151
    %1161 = vst.msk [vmem:[%s8 + $0x18] sm:$0xff] %vm1157, %v1152
    %1162 = vst.msk [vmem:[%s8 + $0x20] sm:$0xff] %vm1157, %v1153
    %1163 = vst.msk [vmem:[%s8 + $0x28] sm:$0xff] %vm1157, %v1154
    %1164 = vst.msk [vmem:[%s8 + $0x30] sm:$0xff] %vm1157, %v1155
    %1165 = vst.msk [vmem:[%s8 + $0x38] sm:$0xff] %vm1157, %v1156
    // Predicated region
    $region54: #{tpu_custom_call.1} parent=1 // pred_check
      _
    $region55: #{tpu_custom_call.1} parent=1 // pred_check_branch
      %1167 = sbr.rel (0) target = $region57
    $region56: #{tpu_custom_call.1} parent=1 // pred_region
      _
    $region57: #{tpu_custom_call.1} parent=1 // pred_fallthru
      _
    // Predicated region
    $region58: #{tpu_custom_call.1} parent=1 // pred_check
      _
    $region59: #{tpu_custom_call.1} parent=1 // pred_check_branch
      %1169 = sbr.rel (0) target = $region61
    $region60: #{tpu_custom_call.1} parent=1 // pred_region
      %s1171 = ssub.s32 128, 128
      %1172 = vsyncadd [#allocation6], %s1171
      %s1174 = sshll.u32 [#allocation13], 4
      %s1175 = int_to_ptr.vmem [resolvable:$true] %s1174
      %1177 = dma.vmem_to_hbm [thread:$0]  %s1175, 128, %s9, [#allocation6]
    $region61: #{tpu_custom_call.1} parent=1 // pred_fallthru
      _
    // Predicated region
    $region62: #{tpu_custom_call.1} parent=1 // pred_check
      _
    $region63: #{tpu_custom_call.1} parent=1 // pred_check_branch
      %1179 = sbr.rel (0) target = $region65
    $region64: #{tpu_custom_call.1} parent=1 // pred_region
      %s1181 = ssub.s32 128, 128
      %1182 = vsyncadd [#allocation15], %s1181
      %s1184 = sshll.u32 [#allocation14], 4
      %s1185 = int_to_ptr.vmem [resolvable:$true] %s1184
      %1187 = dma.vmem_to_hbm [thread:$0]  %s1185, 128, %s10, [#allocation15]
    $region65: #{tpu_custom_call.1} parent=1 // pred_fallthru
      _
    // Predicated region
    $region66: #{tpu_custom_call.1} parent=1 // pred_check
      _
    $region67: #{tpu_custom_call.1} parent=1 // pred_check_branch
      %1189 = sbr.rel (0) target = $region69
    $region68: #{tpu_custom_call.1} parent=1 // pred_region
      _
    $region69: #{tpu_custom_call.1} parent=1 // pred_fallthru
      _
    // Predicated region
    $region70: #{tpu_custom_call.1} parent=1 // pred_check
      _
    $region71: #{tpu_custom_call.1} parent=1 // pred_check_branch
      %1191 = sbr.rel (0) target = $region73
    $region72: #{tpu_custom_call.1} parent=1 // pred_region
      %1192 = dma.done [#allocation6], 128
    $region73: #{tpu_custom_call.1} parent=1 // pred_fallthru
      _
    // Predicated region
    $region74: #{tpu_custom_call.1} parent=1 // pred_check
      _
    $region75: #{tpu_custom_call.1} parent=1 // pred_check_branch
      %1194 = sbr.rel (0) target = $region77
    $region76: #{tpu_custom_call.1} parent=1 // pred_region
      %1195 = dma.done [#allocation15], 128
    $region77: #{tpu_custom_call.1} parent=1 // pred_fallthru
      _
    %1196 = vsyncpa [#allocation5], 1
    %1197 = vsyncpa [#allocation8], 1
    %1198 = vsyncpa [#allocation11], 1
    %1199 = vsyncpa [#allocation6], 1
    %1200 = vsyncpa [#allocation15], 1

</llo_original>
